<compile_context>
chip_gen: v7x
topology: tpu7x:2x2x1
jax: 0.10.0
libtpu: 0.0.40
codegen_flags: <defaults>
</compile_context>

<pallas_src>
import functools

import jax
import jax.numpy as jnp
from jax.experimental import pallas as pl
from jax.experimental.pallas import tpu as pltpu

LANE = 128  # hidden / output dims are zero-padded to multiples of 128 lanes


def _vmem():
    return pl.BlockSpec(memory_space=pltpu.MemorySpace.VMEM)


def _round_up(n, m):
    return ((n + m - 1) // m) * m


def _pad2(w, rows, cols):
    """Zero-pad a 2-D array to (rows, cols), top-left aligned (exact numerics)."""
    if w.shape == (rows, cols):
        return w
    return jnp.zeros((rows, cols), w.dtype).at[: w.shape[0], : w.shape[1]].set(w)


# ------------------------------ kernel helpers -------------------------------

def _build_adjacency(edge_attr_t, edge_index, ewb, *, edge_dim, num_nodes):
    """Dense gated adjacency A[dst, src] = sigmoid(edge_attr @ We + be).

    Built fully in-kernel: per-edge gate on the VPU/EUP, then
    A = dst_onehot @ (gate * src_onehot)^T as one NT bf16 MXU matmul with f32
    accumulation (duplicate (dst,src) edges sum, like a scatter-add).
    edge_attr_t: [edge_dim, E] f32, edge_index: [2, E] i32 (row0=src, row1=dst),
    ewb: [edge_dim+1, 1] f32 (weight column | bias).
    """
    w_col = ewb[:edge_dim, :]                              # [ed, 1]
    b = ewb[edge_dim:edge_dim + 1, :]                      # [1, 1]
    logit = jnp.sum(edge_attr_t * w_col, axis=0, keepdims=True) + b   # [1, E]
    gate = 1.0 / (1.0 + jnp.exp(-logit))                   # [1, E] f32 (EUP)
    num_edges = edge_attr_t.shape[1]
    n_iota = jax.lax.broadcasted_iota(jnp.int32, (num_nodes, num_edges), 0)
    src_oh = (n_iota == edge_index[0:1, :]).astype(jnp.float32)   # [N, E]
    dst_oh = (n_iota == edge_index[1:2, :]).astype(jnp.bfloat16)  # [N, E]
    gated_src = (gate * src_oh).astype(jnp.bfloat16)              # [N, E]
    a = jax.lax.dot_general(
        dst_oh, gated_src,
        dimension_numbers=(((1,), (1,)), ((), ())),        # NT: contract over E
        preferred_element_type=jnp.float32)                # [N(dst), N(src)]
    return a.astype(jnp.bfloat16)


def _gc_combine(msgs, a_bf16, bias, hidden_pad):
    """msgs = [x@Wself | x@Wnbr]  ->  ReLU(self + A @ nbr + b)."""
    self_msg = msgs[:, :hidden_pad]
    nbr_feat = msgs[:, hidden_pad:]
    agg = jnp.dot(a_bf16, nbr_feat.astype(jnp.bfloat16),
                  preferred_element_type=jnp.float32)
    return jnp.maximum(self_msg + agg + bias, 0.0)


def _segment_max(h, num_segments, seg_size):
    """Max over contiguous equal-size row segments: one dense reduce."""
    return jnp.max(h.reshape(num_segments, seg_size, h.shape[-1]), axis=1)


# ------------------------------ fused kernel ---------------------------------

def _fused_kernel(
    x_ref, pos_ref,
    ea1_ref, ei1_ref, ewb1_ref,
    ea2_ref, ei2_ref, ewb2_ref,
    gc1_w0_ref, gc1_wr_ref, gc1_b_ref,
    gc2_wh0_ref, gc2_wp0_ref, gc2_wr_ref, gc2_b_ref,
    cls_w1_ref, cls_b1_ref, cls_w2_ref, cls_b2_ref,
    o_ref,
    *, n_layers_1, n_layers_2, edge_dim_1, edge_dim_2,
    num_local_nodes, num_sets, set_size, num_graphs, nodes_per_graph,
    h1_pad, h2_pad,
):
    # --- local gated adjacency + graphconv_1 (all layers resident in vregs) ---
    a1 = _build_adjacency(ea1_ref[...], ei1_ref[...], ewb1_ref[...],
                          edge_dim=edge_dim_1, num_nodes=num_local_nodes)
    msgs = jnp.dot(x_ref[...].astype(jnp.bfloat16), gc1_w0_ref[...],
                   preferred_element_type=jnp.float32)          # [N, 2*H1p]
    h = _gc_combine(msgs, a1, gc1_b_ref[0], h1_pad)
    for l in range(n_layers_1 - 1):                             # static unroll
        msgs = jnp.dot(h.astype(jnp.bfloat16), gc1_wr_ref[l],
                       preferred_element_type=jnp.float32)
        h = _gc_combine(msgs, a1, gc1_b_ref[l + 1], h1_pad)

    # --- per-set max pool: out.view(G, P, H).max(dim=1) ---
    hp = _segment_max(h, num_sets, set_size)                    # [G, H1p]

    # --- global gated adjacency + graphconv_2; layer 0 fuses cat((h, pos)) ---
    a2 = _build_adjacency(ea2_ref[...], ei2_ref[...], ewb2_ref[...],
                          edge_dim=edge_dim_2, num_nodes=num_sets)
    msgs = (jnp.dot(hp.astype(jnp.bfloat16), gc2_wh0_ref[...],
                    preferred_element_type=jnp.float32)
            + jnp.dot(pos_ref[...].astype(jnp.bfloat16), gc2_wp0_ref[...],
                      preferred_element_type=jnp.float32))
    h2 = _gc_combine(msgs, a2, gc2_b_ref[0], h2_pad)
    for l in range(n_layers_2 - 1):
        msgs = jnp.dot(h2.astype(jnp.bfloat16), gc2_wr_ref[l],
                       preferred_element_type=jnp.float32)
        h2 = _gc_combine(msgs, a2, gc2_b_ref[l + 1], h2_pad)

    # --- global max pool + FCClassifier (Linear -> ReLU -> Linear) ---
    pooled = _segment_max(h2, num_graphs, nodes_per_graph)      # [B, H2p]
    fc = jnp.maximum(
        jnp.dot(pooled.astype(jnp.bfloat16), cls_w1_ref[...],
                preferred_element_type=jnp.float32) + cls_b1_ref[...], 0.0)
    # lane-dense [B, out_pad] store; wrapper slices to out_dim.
    o_ref[...] = (jnp.dot(fc.astype(jnp.bfloat16), cls_w2_ref[...],
                          preferred_element_type=jnp.float32) + cls_b2_ref[...])


# ------------------------------ JAX wrapper ----------------------------------

def graph_of_graphs_forward(kp, x, edge_index, edge_attr, pos,
                            global_edge_index, global_edge_attr, batch_size,
                            *, out_dim):
    num_local_nodes = x.shape[0]
    num_sets = pos.shape[0]                       # global nodes == local sets
    set_size = num_local_nodes // num_sets
    nodes_per_graph = num_sets // batch_size

    n_layers_1 = kp["gc1_b"].shape[0]
    n_layers_2 = kp["gc2_b"].shape[0]
    h1_pad = kp["gc1_b"].shape[2]
    h2_pad = kp["gc2_b"].shape[2]
    edge_dim_1 = kp["gc1_ewb"].shape[0] - 1
    edge_dim_2 = kp["gc2_ewb"].shape[0] - 1
    out_pad = kp["cls_b2"].shape[1]

    flat = [
        x, pos,
        edge_attr.T, edge_index.astype(jnp.int32), kp["gc1_ewb"],
        global_edge_attr.T, global_edge_index.astype(jnp.int32), kp["gc2_ewb"],
        kp["gc1_w0"], kp["gc1_wrest"], kp["gc1_b"],
        kp["gc2_wh0"], kp["gc2_wp0"], kp["gc2_wrest"], kp["gc2_b"],
        kp["cls_w1"], kp["cls_b1"], kp["cls_w2"], kp["cls_b2"],
    ]
    kern = functools.partial(
        _fused_kernel,
        n_layers_1=n_layers_1, n_layers_2=n_layers_2,
        edge_dim_1=edge_dim_1, edge_dim_2=edge_dim_2,
        num_local_nodes=num_local_nodes, num_sets=num_sets, set_size=set_size,
        num_graphs=batch_size, nodes_per_graph=nodes_per_graph,
        h1_pad=h1_pad, h2_pad=h2_pad)
    out_padded = pl.pallas_call(
        kern,
        out_shape=jax.ShapeDtypeStruct((batch_size, out_pad), jnp.float32),
        in_specs=[_vmem()] * len(flat),
        out_specs=_vmem(),
        # 32 MiB is ample here; raise (and re-derive tiles) before scaling N,
        # noting v7x has only 64 MiB physical VMEM vs 128 MiB on v5e/v6e.
        compiler_params=pltpu.CompilerParams(vmem_limit_bytes=32 * 1024 * 1024),
    )(*flat)
    return out_padded[:, :out_dim]


# ------------------------- parameter init / packing --------------------------

def init_graph_conv_block(key, in_dim, hidden_dim, n_layers, edge_dim):
    keys = jax.random.split(key, 2 * n_layers + 1)
    layers = []
    d = in_dim
    for l in range(n_layers):
        scale = 1.0 / jnp.sqrt(jnp.float32(d))
        layers.append(dict(
            w_self=jax.random.normal(keys[2 * l], (d, hidden_dim),
                                     jnp.float32) * scale,
            w_nbr=jax.random.normal(keys[2 * l + 1], (d, hidden_dim),
                                    jnp.float32) * scale,
            b=jnp.zeros((hidden_dim,), jnp.float32),
        ))
        d = hidden_dim
    edge_w = jax.random.normal(keys[-1], (edge_dim, 1), jnp.float32) \
        * (1.0 / jnp.sqrt(jnp.float32(edge_dim)))
    edge_b = jnp.zeros((1,), jnp.float32)
    return dict(layers=layers, edge_w=edge_w, edge_b=edge_b)


def init_classifier(key, hidden_dim, out_dim):
    k1, k2 = jax.random.split(key)
    s = 1.0 / jnp.sqrt(jnp.float32(hidden_dim))
    return dict(
        w1=jax.random.normal(k1, (hidden_dim, hidden_dim), jnp.float32) * s,
        b1=jnp.zeros((hidden_dim,), jnp.float32),
        w2=jax.random.normal(k2, (hidden_dim, out_dim), jnp.float32) * s,
        b2=jnp.zeros((out_dim,), jnp.float32),
    )


def _merge_w(layer, rows, hidden_pad):
    """[Wself | Wnbr] -> one bf16 [rows, 2*hidden_pad] (128-lane split point)."""
    return jnp.concatenate(
        [_pad2(layer["w_self"], rows, hidden_pad),
         _pad2(layer["w_nbr"], rows, hidden_pad)], axis=1).astype(jnp.bfloat16)


def prepare_kernel_params(params, *, in_dim, h1, h1_pad, h2_pad, out_pad):
    """Pack logical params into padded / merged / stacked bf16 kernel layout."""
    kp = {}
    # edge-gate params as one [edge_dim+1, 1] column (weight | bias) per block
    for name in ("gc1", "gc2"):
        blk = params[name]
        kp[f"{name}_ewb"] = jnp.concatenate(
            [blk["edge_w"], blk["edge_b"][None, :]], axis=0).astype(jnp.float32)

    # graphconv_1: layer-0 weight separate (in_dim rows), rest stacked
    layers1 = params["gc1"]["layers"]
    kp["gc1_w0"] = _merge_w(layers1[0], in_dim, h1_pad)
    if len(layers1) > 1:
        kp["gc1_wrest"] = jnp.stack(
            [_merge_w(l, h1_pad, h1_pad) for l in layers1[1:]])
    else:  # unused placeholder keeps the kernel signature fixed
        kp["gc1_wrest"] = jnp.zeros((1, h1_pad, 2 * h1_pad), jnp.bfloat16)
    kp["gc1_b"] = jnp.stack(
        [_pad2(l["b"][None, :], 1, h1_pad) for l in layers1])        # [L,1,H1p]

    # graphconv_2: layer-0 split into W_h / W_pos (fused concat), rest stacked
    layers2 = params["gc2"]["layers"]
    l0 = layers2[0]
    kp["gc2_wh0"] = jnp.concatenate(
        [_pad2(l0["w_self"][:h1], h1_pad, h2_pad),
         _pad2(l0["w_nbr"][:h1], h1_pad, h2_pad)], axis=1).astype(jnp.bfloat16)
    kp["gc2_wp0"] = jnp.concatenate(
        [_pad2(l0["w_self"][h1:], 3, h2_pad),
         _pad2(l0["w_nbr"][h1:], 3, h2_pad)], axis=1).astype(jnp.bfloat16)
    if len(layers2) > 1:
        kp["gc2_wrest"] = jnp.stack(
            [_merge_w(l, h2_pad, h2_pad) for l in layers2[1:]])
    else:
        kp["gc2_wrest"] = jnp.zeros((1, h2_pad, 2 * h2_pad), jnp.bfloat16)
    kp["gc2_b"] = jnp.stack(
        [_pad2(l["b"][None, :], 1, h2_pad) for l in layers2])        # [L,1,H2p]

    # classifier (out_dim padded to 128 lanes; padded lanes stay exactly zero)
    c = params["cls"]
    kp["cls_w1"] = _pad2(c["w1"], h2_pad, h2_pad).astype(jnp.bfloat16)
    kp["cls_b1"] = _pad2(c["b1"][None, :], 1, h2_pad)
    kp["cls_w2"] = _pad2(c["w2"], h2_pad, out_pad).astype(jnp.bfloat16)
    kp["cls_b2"] = _pad2(c["b2"][None, :], 1, out_pad)
    return kp


# ------------------------- pure-JAX reference (check) ------------------------

def _reference_adjacency(edge_index, edge_attr, num_nodes, edge_w, edge_b):
    logit = jnp.sum(edge_attr * edge_w[:, 0][None, :], axis=1) + edge_b[0]
    gate = (1.0 / (1.0 + jnp.exp(-logit)))
    gate = gate.astype(jnp.bfloat16).astype(jnp.float32)   # match kernel rounding
    src, dst = edge_index[0], edge_index[1]
    a = jnp.zeros((num_nodes, num_nodes), jnp.float32).at[dst, src].add(gate)
    return a.astype(jnp.bfloat16)


def _reference_block(layers, h, a):
    for layer in layers:
        hb = h.astype(jnp.bfloat16)
        s = jnp.dot(hb, layer["w_self"].astype(jnp.bfloat16),
                    preferred_element_type=jnp.float32)
        nf = jnp.dot(hb, layer["w_nbr"].astype(jnp.bfloat16),
                     preferred_element_type=jnp.float32)
        agg = jnp.dot(a, nf.astype(jnp.bfloat16),
                      preferred_element_type=jnp.float32)
        h = jnp.maximum(s + agg + layer["b"][None, :], 0.0)
    return h


def reference_forward(params, x, edge_index, edge_attr, pos,
                      global_edge_index, global_edge_attr, batch_size):
    n1, g = x.shape[0], pos.shape[0]
    a1 = _reference_adjacency(edge_index, edge_attr, n1,
                              params["gc1"]["edge_w"], params["gc1"]["edge_b"])
    a2 = _reference_adjacency(global_edge_index, global_edge_attr, g,
                              params["gc2"]["edge_w"], params["gc2"]["edge_b"])
    h = _reference_block(params["gc1"]["layers"], x, a1)
    h = jnp.max(h.reshape(g, -1, h.shape[-1]), axis=1)
    h = jnp.concatenate([h, pos], axis=-1)
    h = _reference_block(params["gc2"]["layers"], h, a2)
    h = jnp.max(h.reshape(batch_size, -1, h.shape[-1]), axis=1)
    c = params["cls"]
    fc = jnp.maximum(
        jnp.dot(h.astype(jnp.bfloat16), c["w1"].astype(jnp.bfloat16),
                preferred_element_type=jnp.float32) + c["b1"][None, :], 0.0)
    return jnp.dot(fc.astype(jnp.bfloat16), c["w2"].astype(jnp.bfloat16),
                   preferred_element_type=jnp.float32) + c["b2"][None, :]


# ----------------------------------- main ------------------------------------

if __name__ == "__main__":
    B = 2            # batch_size (number of point clouds / graphs of graphs)
    G_PER = 4        # global nodes (local sets) per cloud
    G = B * G_PER    # total global nodes  == data.pos.shape[0]
    P = 8            # points per local set
    N1 = G * P       # total local points
    IN_DIM = 3
    HIDDEN1 = 32
    HIDDEN2 = 32
    OUT_DIM = 10
    N_LAYERS_1 = 2
    N_LAYERS_2 = 2
    EDGE_DIM = 4     # global edge-attr dim; local edge_dim = 1

    H1_PAD = _round_up(HIDDEN1, LANE)
    H2_PAD = _round_up(HIDDEN2, LANE)
    OUT_PAD = _round_up(OUT_DIM, LANE)

    key = jax.random.PRNGKey(0)
    k_params, k_x, k_pos, k_ea1, k_ea2 = jax.random.split(key, 5)
    k1, k2, k3 = jax.random.split(k_params, 3)

    params = dict(
        gc1=init_graph_conv_block(k1, IN_DIM, HIDDEN1, N_LAYERS_1, 1),
        gc2=init_graph_conv_block(k2, HIDDEN1 + 3, HIDDEN2, N_LAYERS_2,
                                  EDGE_DIM),
        cls=init_classifier(k3, HIDDEN2, OUT_DIM),
    )
    kernel_params = prepare_kernel_params(params, in_dim=IN_DIM, h1=HIDDEN1,
                                          h1_pad=H1_PAD, h2_pad=H2_PAD,
                                          out_pad=OUT_PAD)

    # data.x: local point features; data.pos: global-node positions
    x = jax.random.normal(k_x, (N1, IN_DIM), jnp.float32)
    pos = jax.random.normal(k_pos, (G, 3), jnp.float32)

    # local edges: bidirectional ring inside each set of P points
    src, dst = [], []
    for g in range(G):
        for p in range(P):
            a_ = g * P + p
            b_ = g * P + (p + 1) % P
            src += [a_, b_]
            dst += [b_, a_]
    edge_index = jnp.array([src, dst], dtype=jnp.int32)
    edge_attr = jax.random.uniform(k_ea1, (edge_index.shape[1], 1), jnp.float32)

    # global edges: bidirectional ring among the G_PER sets of each cloud
    gsrc, gdst = [], []
    for c in range(B):
        for i in range(G_PER):
            a_ = c * G_PER + i
            b_ = c * G_PER + (i + 1) % G_PER
            gsrc += [a_, b_]
            gdst += [b_, a_]
    global_edge_index = jnp.array([gsrc, gdst], dtype=jnp.int32)
    global_edge_attr = jax.random.uniform(
        k_ea2, (global_edge_index.shape[1], EDGE_DIM), jnp.float32)

    fwd = jax.jit(functools.partial(graph_of_graphs_forward, out_dim=OUT_DIM),
                  static_argnums=(7,))
    out = fwd(kernel_params, x, edge_index, edge_attr, pos,
              global_edge_index, global_edge_attr, B)
    out = jax.block_until_ready(out)

    assert out.shape == (B, OUT_DIM), out.shape
    assert out.dtype == jnp.float32

    # Pure-JAX reference with the same bf16-matmul / f32-accum policy.
    ref = reference_forward(params, x, edge_index, edge_attr, pos,
                            global_edge_index, global_edge_attr, B)
    ref = jax.block_until_ready(ref)
    max_err = float(jnp.max(jnp.abs(out - ref)))
    assert max_err < 1e-2, f"kernel/reference mismatch: max_err={max_err}"

    print("KERNEL_OK")
</pallas_src>

<mosaic_0001>
module attributes {stable_mosaic.version = 11 : i64} {
  func.func @_fused_kernel(%arg0: memref<64x3xf32, #tpu.memory_space<vmem>>, %arg1: memref<8x3xf32, #tpu.memory_space<vmem>>, %arg2: memref<1x128xf32, #tpu.memory_space<vmem>>, %arg3: memref<2x128xi32, #tpu.memory_space<vmem>>, %arg4: memref<2x1xf32, #tpu.memory_space<vmem>>, %arg5: memref<4x16xf32, #tpu.memory_space<vmem>>, %arg6: memref<2x16xi32, #tpu.memory_space<vmem>>, %arg7: memref<5x1xf32, #tpu.memory_space<vmem>>, %arg8: memref<3x256xbf16, #tpu.memory_space<vmem>>, %arg9: memref<1x128x256xbf16, #tpu.memory_space<vmem>>, %arg10: memref<2x1x128xf32, #tpu.memory_space<vmem>>, %arg11: memref<128x256xbf16, #tpu.memory_space<vmem>>, %arg12: memref<3x256xbf16, #tpu.memory_space<vmem>>, %arg13: memref<1x128x256xbf16, #tpu.memory_space<vmem>>, %arg14: memref<2x1x128xf32, #tpu.memory_space<vmem>>, %arg15: memref<128x128xbf16, #tpu.memory_space<vmem>>, %arg16: memref<1x128xf32, #tpu.memory_space<vmem>>, %arg17: memref<128x128xbf16, #tpu.memory_space<vmem>>, %arg18: memref<1x128xf32, #tpu.memory_space<vmem>>, %arg19: memref<2x128xf32, #tpu.memory_space<vmem>>) attributes {dimension_semantics = [], scalar_prefetch = 0 : i64, scratch_operands = 0 : i64, tpu.core_type = #tpu.core_type<tc>} {
    %c0 = arith.constant 0 : index
    %c0_0 = arith.constant 0 : index
    %0 = vector.load %arg2[%c0, %c0_0] : memref<1x128xf32, #tpu.memory_space<vmem>>, vector<1x128xf32>
    %c0_1 = arith.constant 0 : index
    %c0_2 = arith.constant 0 : index
    %1 = vector.load %arg3[%c0_1, %c0_2] : memref<2x128xi32, #tpu.memory_space<vmem>>, vector<2x128xi32>
    %c0_3 = arith.constant 0 : index
    %c0_4 = arith.constant 0 : index
    %2 = vector.load %arg4[%c0_3, %c0_4] : memref<2x1xf32, #tpu.memory_space<vmem>>, vector<2x1xf32>
    %3 = vector.extract_strided_slice %2 {offsets = [0, 0], sizes = [1, 1], strides = [1, 1]} : vector<2x1xf32> to vector<1x1xf32>
    %4 = vector.extract_strided_slice %2 {offsets = [1, 0], sizes = [1, 1], strides = [1, 1]} : vector<2x1xf32> to vector<1x1xf32>
    %5 = vector.broadcast %3 : vector<1x1xf32> to vector<1x128xf32>
    %6 = arith.mulf %0, %5 : vector<1x128xf32>
    %cst = arith.constant dense<0.000000e+00> : vector<128xf32>
    %7 = vector.multi_reduction <add>, %6, %cst [0] : vector<1x128xf32> to vector<128xf32>
    %8 = vector.shape_cast %7 : vector<128xf32> to vector<1x128xf32>
    %9 = vector.broadcast %4 : vector<1x1xf32> to vector<1x128xf32>
    %10 = arith.addf %8, %9 : vector<1x128xf32>
    %cst_5 = arith.constant 0.000000e+00 : f32
    %11 = vector.broadcast %cst_5 : f32 to vector<1x128xf32>
    %12 = arith.subf %11, %10 : vector<1x128xf32>
    %13 = math.exp %12 : vector<1x128xf32>
    %cst_6 = arith.constant 1.000000e+00 : f32
    %14 = vector.broadcast %cst_6 : f32 to vector<1x128xf32>
    %15 = arith.addf %14, %13 : vector<1x128xf32>
    %cst_7 = arith.constant 1.000000e+00 : f32
    %16 = vector.broadcast %cst_7 : f32 to vector<1x128xf32>
    %17 = arith.divf %16, %15 : vector<1x128xf32>
    %18 = tpu.iota {dimensions = array<i32: 0>} : vector<64x128xi32>
    %19 = vector.extract_strided_slice %1 {offsets = [0, 0], sizes = [1, 128], strides = [1, 1]} : vector<2x128xi32> to vector<1x128xi32>
    %20 = vector.broadcast %19 : vector<1x128xi32> to vector<64x128xi32>
    %21 = arith.cmpi eq, %18, %20 : vector<64x128xi32>
    %22 = arith.extui %21 : vector<64x128xi1> to vector<64x128xi32>
    %23 = arith.sitofp %22 : vector<64x128xi32> to vector<64x128xf32>
    %24 = vector.extract_strided_slice %1 {offsets = [1, 0], sizes = [1, 128], strides = [1, 1]} : vector<2x128xi32> to vector<1x128xi32>
    %25 = vector.broadcast %24 : vector<1x128xi32> to vector<64x128xi32>
    %26 = arith.cmpi eq, %18, %25 : vector<64x128xi32>
    %27 = arith.extui %26 : vector<64x128xi1> to vector<64x128xi32>
    %28 = arith.sitofp %27 : vector<64x128xi32> to vector<64x128xf32>
    %29 = arith.truncf %28 : vector<64x128xf32> to vector<64x128xbf16>
    %30 = vector.broadcast %17 : vector<1x128xf32> to vector<64x128xf32>
    %31 = arith.mulf %30, %23 : vector<64x128xf32>
    %32 = arith.truncf %31 : vector<64x128xf32> to vector<64x128xbf16>
    %cst_8 = arith.constant dense<0.000000e+00> : vector<64x64xf32>
    %33 = tpu.matmul %29, %32, %cst_8 {dimension_numbers = #tpu.dot_dimension_numbers<[1], [1], [0], [0], [0, 0, 1, 0], [], []>} : vector<64x128xbf16>, vector<64x128xbf16>, vector<64x64xf32> -> vector<64x64xf32>
    %34 = arith.truncf %33 : vector<64x64xf32> to vector<64x64xbf16>
    %c0_9 = arith.constant 0 : index
    %c0_10 = arith.constant 0 : index
    %35 = vector.load %arg0[%c0_9, %c0_10] : memref<64x3xf32, #tpu.memory_space<vmem>>, vector<64x3xf32>
    %36 = arith.truncf %35 : vector<64x3xf32> to vector<64x3xbf16>
    %c0_11 = arith.constant 0 : index
    %c0_12 = arith.constant 0 : index
    %37 = vector.load %arg8[%c0_11, %c0_12] : memref<3x256xbf16, #tpu.memory_space<vmem>>, vector<3x256xbf16>
    %cst_13 = arith.constant dense<0.000000e+00> : vector<64x256xf32>
    %38 = tpu.matmul %36, %37, %cst_13 {dimension_numbers = #tpu.dot_dimension_numbers<[1], [0], [0], [1], [0, 0, 1, 1], [], []>} : vector<64x3xbf16>, vector<3x256xbf16>, vector<64x256xf32> -> vector<64x256xf32>
    %c0_14 = arith.constant 0 : index
    %c0_15 = arith.constant 0 : index
    %c0_16 = arith.constant 0 : index
    %39 = vector.load %arg10[%c0_14, %c0_15, %c0_16] : memref<2x1x128xf32, #tpu.memory_space<vmem>>, vector<1x1x128xf32>
    %40 = vector.shape_cast %39 : vector<1x1x128xf32> to vector<1x128xf32>
    %41 = vector.extract_strided_slice %38 {offsets = [0, 0], sizes = [64, 128], strides = [1, 1]} : vector<64x256xf32> to vector<64x128xf32>
    %42 = vector.extract_strided_slice %38 {offsets = [0, 128], sizes = [64, 128], strides = [1, 1]} : vector<64x256xf32> to vector<64x128xf32>
    %43 = arith.truncf %42 : vector<64x128xf32> to vector<64x128xbf16>
    %cst_17 = arith.constant dense<0.000000e+00> : vector<64x128xf32>
    %44 = tpu.matmul %34, %43, %cst_17 {dimension_numbers = #tpu.dot_dimension_numbers<[1], [0], [0], [1], [0, 0, 1, 1], [], []>} : vector<64x64xbf16>, vector<64x128xbf16>, vector<64x128xf32> -> vector<64x128xf32>
    %45 = arith.addf %41, %44 : vector<64x128xf32>
    %46 = vector.broadcast %40 : vector<1x128xf32> to vector<64x128xf32>
    %47 = arith.addf %45, %46 : vector<64x128xf32>
    %cst_18 = arith.constant 0.000000e+00 : f32
    %48 = vector.broadcast %cst_18 : f32 to vector<64x128xf32>
    %49 = arith.maximumf %47, %48 : vector<64x128xf32>
    %50 = arith.truncf %49 : vector<64x128xf32> to vector<64x128xbf16>
    %c0_19 = arith.constant 0 : index
    %c0_20 = arith.constant 0 : index
    %c0_21 = arith.constant 0 : index
    %51 = vector.load %arg9[%c0_19, %c0_20, %c0_21] : memref<1x128x256xbf16, #tpu.memory_space<vmem>>, vector<1x128x256xbf16>
    %52 = vector.shape_cast %51 : vector<1x128x256xbf16> to vector<128x256xbf16>
    %cst_22 = arith.constant dense<0.000000e+00> : vector<64x256xf32>
    %53 = tpu.matmul %50, %52, %cst_22 {dimension_numbers = #tpu.dot_dimension_numbers<[1], [0], [0], [1], [0, 0, 1, 1], [], []>} : vector<64x128xbf16>, vector<128x256xbf16>, vector<64x256xf32> -> vector<64x256xf32>
    %c1 = arith.constant 1 : index
    %c0_23 = arith.constant 0 : index
    %c0_24 = arith.constant 0 : index
    %54 = vector.load %arg10[%c1, %c0_23, %c0_24] : memref<2x1x128xf32, #tpu.memory_space<vmem>>, vector<1x1x128xf32>
    %55 = vector.shape_cast %54 : vector<1x1x128xf32> to vector<1x128xf32>
    %56 = vector.extract_strided_slice %53 {offsets = [0, 0], sizes = [64, 128], strides = [1, 1]} : vector<64x256xf32> to vector<64x128xf32>
    %57 = vector.extract_strided_slice %53 {offsets = [0, 128], sizes = [64, 128], strides = [1, 1]} : vector<64x256xf32> to vector<64x128xf32>
    %58 = arith.truncf %57 : vector<64x128xf32> to vector<64x128xbf16>
    %cst_25 = arith.constant dense<0.000000e+00> : vector<64x128xf32>
    %59 = tpu.matmul %34, %58, %cst_25 {dimension_numbers = #tpu.dot_dimension_numbers<[1], [0], [0], [1], [0, 0, 1, 1], [], []>} : vector<64x64xbf16>, vector<64x128xbf16>, vector<64x128xf32> -> vector<64x128xf32>
    %60 = arith.addf %56, %59 : vector<64x128xf32>
    %61 = vector.broadcast %55 : vector<1x128xf32> to vector<64x128xf32>
    %62 = arith.addf %60, %61 : vector<64x128xf32>
    %cst_26 = arith.constant 0.000000e+00 : f32
    %63 = vector.broadcast %cst_26 : f32 to vector<64x128xf32>
    %64 = arith.maximumf %62, %63 : vector<64x128xf32>
    %65 = vector.shape_cast %64 : vector<64x128xf32> to vector<8x8x128xf32>
    %cst_27 = arith.constant dense<0xFF800000> : vector<8x128xf32>
    %66 = vector.multi_reduction <maximumf>, %65, %cst_27 [1] : vector<8x8x128xf32> to vector<8x128xf32>
    %c0_28 = arith.constant 0 : index
    %c0_29 = arith.constant 0 : index
    %67 = vector.load %arg5[%c0_28, %c0_29] : memref<4x16xf32, #tpu.memory_space<vmem>>, vector<4x16xf32>
    %c0_30 = arith.constant 0 : index
    %c0_31 = arith.constant 0 : index
    %68 = vector.load %arg6[%c0_30, %c0_31] : memref<2x16xi32, #tpu.memory_space<vmem>>, vector<2x16xi32>
    %c0_32 = arith.constant 0 : index
    %c0_33 = arith.constant 0 : index
    %69 = vector.load %arg7[%c0_32, %c0_33] : memref<5x1xf32, #tpu.memory_space<vmem>>, vector<5x1xf32>
    %70 = vector.extract_strided_slice %69 {offsets = [0, 0], sizes = [4, 1], strides = [1, 1]} : vector<5x1xf32> to vector<4x1xf32>
    %71 = vector.extract_strided_slice %69 {offsets = [4, 0], sizes = [1, 1], strides = [1, 1]} : vector<5x1xf32> to vector<1x1xf32>
    %72 = vector.broadcast %70 : vector<4x1xf32> to vector<4x16xf32>
    %73 = arith.mulf %67, %72 : vector<4x16xf32>
    %cst_34 = arith.constant dense<0.000000e+00> : vector<16xf32>
    %74 = vector.multi_reduction <add>, %73, %cst_34 [0] : vector<4x16xf32> to vector<16xf32>
    %75 = vector.shape_cast %74 : vector<16xf32> to vector<1x16xf32>
    %76 = vector.broadcast %71 : vector<1x1xf32> to vector<1x16xf32>
    %77 = arith.addf %75, %76 : vector<1x16xf32>
    %cst_35 = arith.constant 0.000000e+00 : f32
    %78 = vector.broadcast %cst_35 : f32 to vector<1x16xf32>
    %79 = arith.subf %78, %77 : vector<1x16xf32>
    %80 = math.exp %79 : vector<1x16xf32>
    %cst_36 = arith.constant 1.000000e+00 : f32
    %81 = vector.broadcast %cst_36 : f32 to vector<1x16xf32>
    %82 = arith.addf %81, %80 : vector<1x16xf32>
    %cst_37 = arith.constant 1.000000e+00 : f32
    %83 = vector.broadcast %cst_37 : f32 to vector<1x16xf32>
    %84 = arith.divf %83, %82 : vector<1x16xf32>
    %85 = tpu.iota {dimensions = array<i32: 0>} : vector<8x16xi32>
    %86 = vector.extract_strided_slice %68 {offsets = [0, 0], sizes = [1, 16], strides = [1, 1]} : vector<2x16xi32> to vector<1x16xi32>
    %87 = vector.broadcast %86 : vector<1x16xi32> to vector<8x16xi32>
    %88 = arith.cmpi eq, %85, %87 : vector<8x16xi32>
    %89 = arith.extui %88 : vector<8x16xi1> to vector<8x16xi32>
    %90 = arith.sitofp %89 : vector<8x16xi32> to vector<8x16xf32>
    %91 = vector.extract_strided_slice %68 {offsets = [1, 0], sizes = [1, 16], strides = [1, 1]} : vector<2x16xi32> to vector<1x16xi32>
    %92 = vector.broadcast %91 : vector<1x16xi32> to vector<8x16xi32>
    %93 = arith.cmpi eq, %85, %92 : vector<8x16xi32>
    %94 = arith.extui %93 : vector<8x16xi1> to vector<8x16xi32>
    %95 = arith.sitofp %94 : vector<8x16xi32> to vector<8x16xf32>
    %96 = arith.truncf %95 : vector<8x16xf32> to vector<8x16xbf16>
    %97 = vector.broadcast %84 : vector<1x16xf32> to vector<8x16xf32>
    %98 = arith.mulf %97, %90 : vector<8x16xf32>
    %99 = arith.truncf %98 : vector<8x16xf32> to vector<8x16xbf16>
    %cst_38 = arith.constant dense<0.000000e+00> : vector<8x8xf32>
    %100 = tpu.matmul %96, %99, %cst_38 {dimension_numbers = #tpu.dot_dimension_numbers<[1], [1], [0], [0], [0, 0, 1, 0], [], []>} : vector<8x16xbf16>, vector<8x16xbf16>, vector<8x8xf32> -> vector<8x8xf32>
    %101 = arith.truncf %100 : vector<8x8xf32> to vector<8x8xbf16>
    %102 = arith.truncf %66 : vector<8x128xf32> to vector<8x128xbf16>
    %c0_39 = arith.constant 0 : index
    %c0_40 = arith.constant 0 : index
    %103 = vector.load %arg11[%c0_39, %c0_40] : memref<128x256xbf16, #tpu.memory_space<vmem>>, vector<128x256xbf16>
    %cst_41 = arith.constant dense<0.000000e+00> : vector<8x256xf32>
    %104 = tpu.matmul %102, %103, %cst_41 {dimension_numbers = #tpu.dot_dimension_numbers<[1], [0], [0], [1], [0, 0, 1, 1], [], []>} : vector<8x128xbf16>, vector<128x256xbf16>, vector<8x256xf32> -> vector<8x256xf32>
    %c0_42 = arith.constant 0 : index
    %c0_43 = arith.constant 0 : index
    %105 = vector.load %arg1[%c0_42, %c0_43] : memref<8x3xf32, #tpu.memory_space<vmem>>, vector<8x3xf32>
    %106 = arith.truncf %105 : vector<8x3xf32> to vector<8x3xbf16>
    %c0_44 = arith.constant 0 : index
    %c0_45 = arith.constant 0 : index
    %107 = vector.load %arg12[%c0_44, %c0_45] : memref<3x256xbf16, #tpu.memory_space<vmem>>, vector<3x256xbf16>
    %cst_46 = arith.constant dense<0.000000e+00> : vector<8x256xf32>
    %108 = tpu.matmul %106, %107, %cst_46 {dimension_numbers = #tpu.dot_dimension_numbers<[1], [0], [0], [1], [0, 0, 1, 1], [], []>} : vector<8x3xbf16>, vector<3x256xbf16>, vector<8x256xf32> -> vector<8x256xf32>
    %109 = arith.addf %104, %108 : vector<8x256xf32>
    %c0_47 = arith.constant 0 : index
    %c0_48 = arith.constant 0 : index
    %c0_49 = arith.constant 0 : index
    %110 = vector.load %arg14[%c0_47, %c0_48, %c0_49] : memref<2x1x128xf32, #tpu.memory_space<vmem>>, vector<1x1x128xf32>
    %111 = vector.shape_cast %110 : vector<1x1x128xf32> to vector<1x128xf32>
    %112 = vector.extract_strided_slice %109 {offsets = [0, 0], sizes = [8, 128], strides = [1, 1]} : vector<8x256xf32> to vector<8x128xf32>
    %113 = vector.extract_strided_slice %109 {offsets = [0, 128], sizes = [8, 128], strides = [1, 1]} : vector<8x256xf32> to vector<8x128xf32>
    %114 = arith.truncf %113 : vector<8x128xf32> to vector<8x128xbf16>
    %cst_50 = arith.constant dense<0.000000e+00> : vector<8x128xf32>
    %115 = tpu.matmul %101, %114, %cst_50 {dimension_numbers = #tpu.dot_dimension_numbers<[1], [0], [0], [1], [0, 0, 1, 1], [], []>} : vector<8x8xbf16>, vector<8x128xbf16>, vector<8x128xf32> -> vector<8x128xf32>
    %116 = arith.addf %112, %115 : vector<8x128xf32>
    %117 = vector.broadcast %111 : vector<1x128xf32> to vector<8x128xf32>
    %118 = arith.addf %116, %117 : vector<8x128xf32>
    %cst_51 = arith.constant 0.000000e+00 : f32
    %119 = vector.broadcast %cst_51 : f32 to vector<8x128xf32>
    %120 = arith.maximumf %118, %119 : vector<8x128xf32>
    %121 = arith.truncf %120 : vector<8x128xf32> to vector<8x128xbf16>
    %c0_52 = arith.constant 0 : index
    %c0_53 = arith.constant 0 : index
    %c0_54 = arith.constant 0 : index
    %122 = vector.load %arg13[%c0_52, %c0_53, %c0_54] : memref<1x128x256xbf16, #tpu.memory_space<vmem>>, vector<1x128x256xbf16>
    %123 = vector.shape_cast %122 : vector<1x128x256xbf16> to vector<128x256xbf16>
    %cst_55 = arith.constant dense<0.000000e+00> : vector<8x256xf32>
    %124 = tpu.matmul %121, %123, %cst_55 {dimension_numbers = #tpu.dot_dimension_numbers<[1], [0], [0], [1], [0, 0, 1, 1], [], []>} : vector<8x128xbf16>, vector<128x256xbf16>, vector<8x256xf32> -> vector<8x256xf32>
    %c1_56 = arith.constant 1 : index
    %c0_57 = arith.constant 0 : index
    %c0_58 = arith.constant 0 : index
    %125 = vector.load %arg14[%c1_56, %c0_57, %c0_58] : memref<2x1x128xf32, #tpu.memory_space<vmem>>, vector<1x1x128xf32>
    %126 = vector.shape_cast %125 : vector<1x1x128xf32> to vector<1x128xf32>
    %127 = vector.extract_strided_slice %124 {offsets = [0, 0], sizes = [8, 128], strides = [1, 1]} : vector<8x256xf32> to vector<8x128xf32>
    %128 = vector.extract_strided_slice %124 {offsets = [0, 128], sizes = [8, 128], strides = [1, 1]} : vector<8x256xf32> to vector<8x128xf32>
    %129 = arith.truncf %128 : vector<8x128xf32> to vector<8x128xbf16>
    %cst_59 = arith.constant dense<0.000000e+00> : vector<8x128xf32>
    %130 = tpu.matmul %101, %129, %cst_59 {dimension_numbers = #tpu.dot_dimension_numbers<[1], [0], [0], [1], [0, 0, 1, 1], [], []>} : vector<8x8xbf16>, vector<8x128xbf16>, vector<8x128xf32> -> vector<8x128xf32>
    %131 = arith.addf %127, %130 : vector<8x128xf32>
    %132 = vector.broadcast %126 : vector<1x128xf32> to vector<8x128xf32>
    %133 = arith.addf %131, %132 : vector<8x128xf32>
    %cst_60 = arith.constant 0.000000e+00 : f32
    %134 = vector.broadcast %cst_60 : f32 to vector<8x128xf32>
    %135 = arith.maximumf %133, %134 : vector<8x128xf32>
    %136 = vector.shape_cast %135 : vector<8x128xf32> to vector<2x4x128xf32>
    %cst_61 = arith.constant dense<0xFF800000> : vector<2x128xf32>
    %137 = vector.multi_reduction <maximumf>, %136, %cst_61 [1] : vector<2x4x128xf32> to vector<2x128xf32>
    %138 = arith.truncf %137 : vector<2x128xf32> to vector<2x128xbf16>
    %c0_62 = arith.constant 0 : index
    %c0_63 = arith.constant 0 : index
    %139 = vector.load %arg15[%c0_62, %c0_63] : memref<128x128xbf16, #tpu.memory_space<vmem>>, vector<128x128xbf16>
    %cst_64 = arith.constant dense<0.000000e+00> : vector<2x128xf32>
    %140 = tpu.matmul %138, %139, %cst_64 {dimension_numbers = #tpu.dot_dimension_numbers<[1], [0], [0], [1], [0, 0, 1, 1], [], []>} : vector<2x128xbf16>, vector<128x128xbf16>, vector<2x128xf32> -> vector<2x128xf32>
    %c0_65 = arith.constant 0 : index
    %c0_66 = arith.constant 0 : index
    %141 = vector.load %arg16[%c0_65, %c0_66] : memref<1x128xf32, #tpu.memory_space<vmem>>, vector<1x128xf32>
    %142 = vector.broadcast %141 : vector<1x128xf32> to vector<2x128xf32>
    %143 = arith.addf %140, %142 : vector<2x128xf32>
    %cst_67 = arith.constant 0.000000e+00 : f32
    %144 = vector.broadcast %cst_67 : f32 to vector<2x128xf32>
    %145 = arith.maximumf %143, %144 : vector<2x128xf32>
    %146 = arith.truncf %145 : vector<2x128xf32> to vector<2x128xbf16>
    %c0_68 = arith.constant 0 : index
    %c0_69 = arith.constant 0 : index
    %147 = vector.load %arg17[%c0_68, %c0_69] : memref<128x128xbf16, #tpu.memory_space<vmem>>, vector<128x128xbf16>
    %cst_70 = arith.constant dense<0.000000e+00> : vector<2x128xf32>
    %148 = tpu.matmul %146, %147, %cst_70 {dimension_numbers = #tpu.dot_dimension_numbers<[1], [0], [0], [1], [0, 0, 1, 1], [], []>} : vector<2x128xbf16>, vector<128x128xbf16>, vector<2x128xf32> -> vector<2x128xf32>
    %c0_71 = arith.constant 0 : index
    %c0_72 = arith.constant 0 : index
    %149 = vector.load %arg18[%c0_71, %c0_72] : memref<1x128xf32, #tpu.memory_space<vmem>>, vector<1x128xf32>
    %150 = vector.broadcast %149 : vector<1x128xf32> to vector<2x128xf32>
    %151 = arith.addf %148, %150 : vector<2x128xf32>
    %c0_73 = arith.constant 0 : index
    %c0_74 = arith.constant 0 : index
    %152 = vector.load %arg19[%c0_73, %c0_74] : memref<2x128xf32, #tpu.memory_space<vmem>>, vector<2x128xf32>
    tpu.vector_store %arg19[%c0_73, %c0_74], %151 {strides = array<i32>} : memref<2x128xf32, #tpu.memory_space<vmem>>, vector<2x128xf32>,
    return
  }
}

</mosaic_0001>

<llo_original>
// kernel: graph_of_graphs_forward.1
$region0: #{graph_of_graphs_forward.1}
  #allocation0 [shape = 'u32[]', space=smem, size = 0x4, offset = 0x4, fixed_abs, tag = 'smem constant byte address 0x4 - core index']
  #allocation1 [shape = 'u32[144,128]{1,0:T(1,128)}', space=vmem, size = 0x12000, scoped, tag = 'internal scratch']
  %s0 = inlined_call_operand.vmem [shape: f32[64,3], index: 0, kind: input, shape index: {}]
  %s1 = inlined_call_operand.vmem [shape: f32[8,3], index: 1, kind: input, shape index: {}]
  %s2 = inlined_call_operand.vmem [shape: f32[1,128], index: 2, kind: input, shape index: {}]
  %s3 = inlined_call_operand.vmem [shape: s32[2,128], index: 3, kind: input, shape index: {}]
  %s4 = inlined_call_operand.vmem [shape: f32[2,1], index: 4, kind: input, shape index: {}]
  %s5 = inlined_call_operand.vmem [shape: f32[4,16], index: 5, kind: input, shape index: {}]
  %s6 = inlined_call_operand.vmem [shape: s32[2,16], index: 6, kind: input, shape index: {}]
  %s7 = inlined_call_operand.vmem [shape: f32[5,1], index: 7, kind: input, shape index: {}]
  %s8 = inlined_call_operand.vmem [shape: bf16[3,256], index: 8, kind: input, shape index: {}]
  %s9 = inlined_call_operand.hbm [shape: bf16[1,128,256], index: 9, kind: input, shape index: {}]
  %s10 = inlined_call_operand.hbm [shape: f32[2,1,128], index: 10, kind: input, shape index: {}]
  %s11 = inlined_call_operand.vmem [shape: bf16[128,256], index: 11, kind: input, shape index: {}]
  %s12 = inlined_call_operand.vmem [shape: bf16[3,256], index: 12, kind: input, shape index: {}]
  %s13 = inlined_call_operand.hbm [shape: bf16[1,128,256], index: 13, kind: input, shape index: {}]
  %s14 = inlined_call_operand.hbm [shape: f32[2,1,128], index: 14, kind: input, shape index: {}]
  %s15 = inlined_call_operand.hbm [shape: bf16[128,128], index: 15, kind: input, shape index: {}]
  %s16 = inlined_call_operand.hbm [shape: f32[1,128], index: 16, kind: input, shape index: {}]
  %s17 = inlined_call_operand.hbm [shape: bf16[128,128], index: 17, kind: input, shape index: {}]
  %s18 = inlined_call_operand.hbm [shape: f32[1,128], index: 18, kind: input, shape index: {}]
  %s19 = inlined_call_operand.hbm [shape: f32[2,128], index: 19, kind: output, shape index: {}]
  %s20 = sld [smem:[#allocation0]]
  $region118: #{graph_of_graphs_forward.1} parent=0
    _
  %s22 = ssub.s32 1, %s20
  %s23 = scalar_select 0, %s22, %s20
  $region1: #{graph_of_graphs_forward.1} parent=0
    #allocation2 [shape = 'u8[65536]{0}', space=vmem, size = 0x10000, scoped, tag = 'input window, operand 9, single buffered']
    #allocation3 [shape = 's32[1]{0}', space=sflag, size = 0x4, scoped, tag = 'scoped memory for graph_of_graphs_forward.1']
    #allocation4 [shape = 's32[1]{0}', space=sflag, size = 0x4, scoped, tag = 'scoped memory for graph_of_graphs_forward.1']
    #allocation5 [shape = 'u8[1024]{0}', space=vmem, size = 0x400, scoped, tag = 'input window, operand 10, single buffered']
    #allocation6 [shape = 's32[1]{0}', space=sflag, size = 0x4, scoped, tag = 'scoped memory for graph_of_graphs_forward.1']
    #allocation7 [shape = 'u8[65536]{0}', space=vmem, size = 0x10000, scoped, tag = 'input window, operand 13, single buffered']
    #allocation8 [shape = 'u8[1024]{0}', space=vmem, size = 0x400, scoped, tag = 'input window, operand 14, single buffered']
    #allocation9 [shape = 's32[1]{0}', space=sflag, size = 0x4, scoped, tag = 'scoped memory for graph_of_graphs_forward.1']
    #allocation10 [shape = 'u8[32768]{0}', space=vmem, size = 0x8000, scoped, tag = 'input window, operand 15, single buffered']
    #allocation11 [shape = 'u8[512]{0}', space=vmem, size = 0x400, scoped, tag = 'input window, operand 16, single buffered']
    #allocation12 [shape = 's32[1]{0}', space=sflag, size = 0x4, scoped, tag = 'scoped memory for graph_of_graphs_forward.1']
    #allocation13 [shape = 'u8[32768]{0}', space=vmem, size = 0x8000, scoped, tag = 'input window, operand 17, single buffered']
    #allocation14 [shape = 'u8[512]{0}', space=vmem, size = 0x400, scoped, tag = 'input window, operand 18, single buffered']
    #allocation15 [shape = 's32[1]{0}', space=sflag, size = 0x4, scoped, tag = 'scoped memory for graph_of_graphs_forward.1']
    #allocation16 [shape = 'u8[1024]{0}', space=vmem, size = 0x400, scoped, tag = 'output window, operand 0, single buffered']
    %24 = vsyncpa [#allocation3], 0
    %25 = vsyncpa [#allocation6], 0
    %26 = vsyncpa [#allocation9], 0
    %27 = vsyncpa [#allocation12], 0
    %28 = vsyncpa [#allocation15], 0
    %29 = vsyncpa [#allocation4], 0
    // Predicated region
    $region2: #{graph_of_graphs_forward.1} parent=1 // pred_check
      _
    $region3: #{graph_of_graphs_forward.1} parent=1 // pred_check_branch
      %31 = sbr.rel (0) target = $region5
    $region4: #{graph_of_graphs_forward.1} parent=1 // pred_region
      _
    $region5: #{graph_of_graphs_forward.1} parent=1 // pred_fallthru
      _
    // Predicated region
    $region6: #{graph_of_graphs_forward.1} parent=1 // pred_check
      _
    $region7: #{graph_of_graphs_forward.1} parent=1 // pred_check_branch
      %33 = sbr.rel (0) target = $region9
    $region8: #{graph_of_graphs_forward.1} parent=1 // pred_region
      _
    $region9: #{graph_of_graphs_forward.1} parent=1 // pred_fallthru
      _
    // Predicated region
    $region10: #{graph_of_graphs_forward.1} parent=1 // pred_check
      _
    $region11: #{graph_of_graphs_forward.1} parent=1 // pred_check_branch
      %35 = sbr.rel (0) target = $region13
    $region12: #{graph_of_graphs_forward.1} parent=1 // pred_region
      _
    $region13: #{graph_of_graphs_forward.1} parent=1 // pred_fallthru
      _
    // Predicated region
    $region14: #{graph_of_graphs_forward.1} parent=1 // pred_check
      _
    $region15: #{graph_of_graphs_forward.1} parent=1 // pred_check_branch
      %37 = sbr.rel (0) target = $region17
    $region16: #{graph_of_graphs_forward.1} parent=1 // pred_region
      _
    $region17: #{graph_of_graphs_forward.1} parent=1 // pred_fallthru
      _
    // Predicated region
    $region18: #{graph_of_graphs_forward.1} parent=1 // pred_check
      _
    $region19: #{graph_of_graphs_forward.1} parent=1 // pred_check_branch
      %39 = sbr.rel (0) target = $region21
    $region20: #{graph_of_graphs_forward.1} parent=1 // pred_region
      _
    $region21: #{graph_of_graphs_forward.1} parent=1 // pred_fallthru
      _
    // Predicated region
    $region22: #{graph_of_graphs_forward.1} parent=1 // pred_check
      _
    $region23: #{graph_of_graphs_forward.1} parent=1 // pred_check_branch
      %41 = sbr.rel (0) target = $region25
    $region24: #{graph_of_graphs_forward.1} parent=1 // pred_region
      _
    $region25: #{graph_of_graphs_forward.1} parent=1 // pred_fallthru
      _
    // Predicated region
    $region26: #{graph_of_graphs_forward.1} parent=1 // pred_check
      _
    $region27: #{graph_of_graphs_forward.1} parent=1 // pred_check_branch
      %43 = sbr.rel (0) target = $region29
    $region28: #{graph_of_graphs_forward.1} parent=1 // pred_region
      _
    $region29: #{graph_of_graphs_forward.1} parent=1 // pred_fallthru
      _
    // Predicated region
    $region30: #{graph_of_graphs_forward.1} parent=1 // pred_check
      _
    $region31: #{graph_of_graphs_forward.1} parent=1 // pred_check_branch
      %45 = sbr.rel (0) target = $region33
    $region32: #{graph_of_graphs_forward.1} parent=1 // pred_region
      _
    $region33: #{graph_of_graphs_forward.1} parent=1 // pred_fallthru
      _
    // Predicated region
    $region34: #{graph_of_graphs_forward.1} parent=1 // pred_check
      _
    $region35: #{graph_of_graphs_forward.1} parent=1 // pred_check_branch
      %47 = sbr.rel (0) target = $region37
    $region36: #{graph_of_graphs_forward.1} parent=1 // pred_region
      _
    $region37: #{graph_of_graphs_forward.1} parent=1 // pred_fallthru
      _
    // Predicated region
    $region38: #{graph_of_graphs_forward.1} parent=1 // pred_check
      _
    $region39: #{graph_of_graphs_forward.1} parent=1 // pred_check_branch
      %49 = sbr.rel (0) target = $region41
    $region40: #{graph_of_graphs_forward.1} parent=1 // pred_region
      %s51 = ssub.s32 2048, 2048
      %52 = vsyncadd [#allocation3], %s51
      %s53 = sshll.u32 [#allocation2], 4
      %s54 = int_to_ptr.vmem [resolvable:$true] %s53
      %59 = dma.hbm_to_vmem [thread:$0]  %s9, 2048, %s54, [#allocation3], 128, 128, 8
    $region41: #{graph_of_graphs_forward.1} parent=1 // pred_fallthru
      _
    // Predicated region
    $region42: #{graph_of_graphs_forward.1} parent=1 // pred_check
      _
    $region43: #{graph_of_graphs_forward.1} parent=1 // pred_check_branch
      %61 = sbr.rel (0) target = $region45
    $region44: #{graph_of_graphs_forward.1} parent=1 // pred_region
      %s63 = ssub.s32 32, 32
      %64 = vsyncadd [#allocation6], %s63
      %s65 = sshll.u32 [#allocation5], 4
      %s66 = int_to_ptr.vmem [resolvable:$true] %s65
      %71 = dma.hbm_to_vmem [thread:$0]  %s10, 32, %s66, [#allocation6], 16, 16, 1
    $region45: #{graph_of_graphs_forward.1} parent=1 // pred_fallthru
      _
    // Predicated region
    $region46: #{graph_of_graphs_forward.1} parent=1 // pred_check
      _
    $region47: #{graph_of_graphs_forward.1} parent=1 // pred_check_branch
      %73 = sbr.rel (0) target = $region49
    $region48: #{graph_of_graphs_forward.1} parent=1 // pred_region
      _
    $region49: #{graph_of_graphs_forward.1} parent=1 // pred_fallthru
      _
    // Predicated region
    $region50: #{graph_of_graphs_forward.1} parent=1 // pred_check
      _
    $region51: #{graph_of_graphs_forward.1} parent=1 // pred_check_branch
      %75 = sbr.rel (0) target = $region53
    $region52: #{graph_of_graphs_forward.1} parent=1 // pred_region
      _
    $region53: #{graph_of_graphs_forward.1} parent=1 // pred_fallthru
      _
    // Predicated region
    $region54: #{graph_of_graphs_forward.1} parent=1 // pred_check
      _
    $region55: #{graph_of_graphs_forward.1} parent=1 // pred_check_branch
      %77 = sbr.rel (0) target = $region57
    $region56: #{graph_of_graphs_forward.1} parent=1 // pred_region
      %s79 = ssub.s32 2048, 2048
      %80 = vsyncadd [#allocation6], %s79
      %s81 = sshll.u32 [#allocation7], 4
      %s82 = int_to_ptr.vmem [resolvable:$true] %s81
      %87 = dma.hbm_to_vmem [thread:$0]  %s13, 2048, %s82, [#allocation6], 128, 128, 8
    $region57: #{graph_of_graphs_forward.1} parent=1 // pred_fallthru
      _
    // Predicated region
    $region58: #{graph_of_graphs_forward.1} parent=1 // pred_check
      _
    $region59: #{graph_of_graphs_forward.1} parent=1 // pred_check_branch
      %89 = sbr.rel (0) target = $region61
    $region60: #{graph_of_graphs_forward.1} parent=1 // pred_region
      %s91 = ssub.s32 32, 32
      %92 = vsyncadd [#allocation9], %s91
      %s93 = sshll.u32 [#allocation8], 4
      %s94 = int_to_ptr.vmem [resolvable:$true] %s93
      %99 = dma.hbm_to_vmem [thread:$0]  %s14, 32, %s94, [#allocation9], 16, 16, 1
    $region61: #{graph_of_graphs_forward.1} parent=1 // pred_fallthru
      _
    // Predicated region
    $region62: #{graph_of_graphs_forward.1} parent=1 // pred_check
      _
    $region63: #{graph_of_graphs_forward.1} parent=1 // pred_check_branch
      %101 = sbr.rel (0) target = $region65
    $region64: #{graph_of_graphs_forward.1} parent=1 // pred_region
      %s103 = ssub.s32 1024, 1024
      %104 = vsyncadd [#allocation9], %s103
      %s105 = sshll.u32 [#allocation10], 4
      %s106 = int_to_ptr.vmem [resolvable:$true] %s105
      %111 = dma.hbm_to_vmem [thread:$0]  %s15, 1024, %s106, [#allocation9], 64, 64, 4
    $region65: #{graph_of_graphs_forward.1} parent=1 // pred_fallthru
      _
    // Predicated region
    $region66: #{graph_of_graphs_forward.1} parent=1 // pred_check
      _
    $region67: #{graph_of_graphs_forward.1} parent=1 // pred_check_branch
      %113 = sbr.rel (0) target = $region69
    $region68: #{graph_of_graphs_forward.1} parent=1 // pred_region
      %s115 = ssub.s32 16, 16
      %116 = vsyncadd [#allocation12], %s115
      %s118 = sshll.u32 [#allocation11], 4
      %s119 = int_to_ptr.vmem [resolvable:$true] %s118
      %121 = dma.hbm_to_vmem [thread:$0]  %s16, 16, %s119, [#allocation12]
    $region69: #{graph_of_graphs_forward.1} parent=1 // pred_fallthru
      _
    // Predicated region
    $region70: #{graph_of_graphs_forward.1} parent=1 // pred_check
      _
    $region71: #{graph_of_graphs_forward.1} parent=1 // pred_check_branch
      %123 = sbr.rel (0) target = $region73
    $region72: #{graph_of_graphs_forward.1} parent=1 // pred_region
      %s125 = ssub.s32 1024, 1024
      %126 = vsyncadd [#allocation12], %s125
      %s127 = sshll.u32 [#allocation13], 4
      %s128 = int_to_ptr.vmem [resolvable:$true] %s127
      %133 = dma.hbm_to_vmem [thread:$0]  %s17, 1024, %s128, [#allocation12], 64, 64, 4
    $region73: #{graph_of_graphs_forward.1} parent=1 // pred_fallthru
      _
    // Predicated region
    $region74: #{graph_of_graphs_forward.1} parent=1 // pred_check
      _
    $region75: #{graph_of_graphs_forward.1} parent=1 // pred_check_branch
      %135 = sbr.rel (0) target = $region77
    $region76: #{graph_of_graphs_forward.1} parent=1 // pred_region
      %s137 = ssub.s32 16, 16
      %138 = vsyncadd [#allocation15], %s137
      %s140 = sshll.u32 [#allocation14], 4
      %s141 = int_to_ptr.vmem [resolvable:$true] %s140
      %143 = dma.hbm_to_vmem [thread:$0]  %s18, 16, %s141, [#allocation15]
    $region77: #{graph_of_graphs_forward.1} parent=1 // pred_fallthru
      _
    // Predicated region
    $region78: #{graph_of_graphs_forward.1} parent=1 // pred_check
      _
    $region79: #{graph_of_graphs_forward.1} parent=1 // pred_check_branch
      %145 = sbr.rel (0) target = $region81
    $region80: #{graph_of_graphs_forward.1} parent=1 // pred_region
      %146 = dma.done [#allocation3], 2048
    $region81: #{graph_of_graphs_forward.1} parent=1 // pred_fallthru
      _
    // Predicated region
    $region82: #{graph_of_graphs_forward.1} parent=1 // pred_check
      _
    $region83: #{graph_of_graphs_forward.1} parent=1 // pred_check_branch
      %148 = sbr.rel (0) target = $region85
    $region84: #{graph_of_graphs_forward.1} parent=1 // pred_region
      %149 = dma.done [#allocation6], 32
    $region85: #{graph_of_graphs_forward.1} parent=1 // pred_fallthru
      _
    // Predicated region
    $region86: #{graph_of_graphs_forward.1} parent=1 // pred_check
      _
    $region87: #{graph_of_graphs_forward.1} parent=1 // pred_check_branch
      %151 = sbr.rel (0) target = $region89
    $region88: #{graph_of_graphs_forward.1} parent=1 // pred_region
      %152 = dma.done [#allocation6], 2048
    $region89: #{graph_of_graphs_forward.1} parent=1 // pred_fallthru
      _
    // Predicated region
    $region90: #{graph_of_graphs_forward.1} parent=1 // pred_check
      _
    $region91: #{graph_of_graphs_forward.1} parent=1 // pred_check_branch
      %154 = sbr.rel (0) target = $region93
    $region92: #{graph_of_graphs_forward.1} parent=1 // pred_region
      %155 = dma.done [#allocation9], 32
    $region93: #{graph_of_graphs_forward.1} parent=1 // pred_fallthru
      _
    // Predicated region
    $region94: #{graph_of_graphs_forward.1} parent=1 // pred_check
      _
    $region95: #{graph_of_graphs_forward.1} parent=1 // pred_check_branch
      %157 = sbr.rel (0) target = $region97
    $region96: #{graph_of_graphs_forward.1} parent=1 // pred_region
      %158 = dma.done [#allocation9], 1024
    $region97: #{graph_of_graphs_forward.1} parent=1 // pred_fallthru
      _
    // Predicated region
    $region98: #{graph_of_graphs_forward.1} parent=1 // pred_check
      _
    $region99: #{graph_of_graphs_forward.1} parent=1 // pred_check_branch
      %160 = sbr.rel (0) target = $region101
    $region100: #{graph_of_graphs_forward.1} parent=1 // pred_region
      %161 = dma.done [#allocation12], 16
    $region101: #{graph_of_graphs_forward.1} parent=1 // pred_fallthru
      _
    // Predicated region
    $region102: #{graph_of_graphs_forward.1} parent=1 // pred_check
      _
    $region103: #{graph_of_graphs_forward.1} parent=1 // pred_check_branch
      %163 = sbr.rel (0) target = $region105
    $region104: #{graph_of_graphs_forward.1} parent=1 // pred_region
      %164 = dma.done [#allocation12], 1024
    $region105: #{graph_of_graphs_forward.1} parent=1 // pred_fallthru
      _
    // Predicated region
    $region106: #{graph_of_graphs_forward.1} parent=1 // pred_check
      _
    $region107: #{graph_of_graphs_forward.1} parent=1 // pred_check_branch
      %166 = sbr.rel (0) target = $region109
    $region108: #{graph_of_graphs_forward.1} parent=1 // pred_region
      %167 = dma.done [#allocation15], 16
    $region109: #{graph_of_graphs_forward.1} parent=1 // pred_fallthru
      _
    %v169 = vld [vmem:[%s2] sm:$0x1]
    %v170 = vld [vmem:[%s3] sm:$0x3]
    %v171 = vld [vmem:[%s4] sm:$0x3]
    %173 = vset.pattern.permute.xlu0 0
    %174 = vperm.xlu0 %173, %v171
    %v175 = vpop.permute.xlu0 %174
    %v177 = vmul.f32 %v169, %v175
    %v178 = vadd.f32 %v177, 0.0
    %v179 = vlaneseq
    %v180 = vshrl.u32 %v179, 7
    %v181 = vsub.s32 1, %v180
    %v182 = vrot.slane %v175, %v181
    %v184 = vadd.f32 %v178, %v182
    %v185 = vsub.f32 0.0, %v184
    %v186 = vmul.f32 %v185, 1.442695
    %v187 = vpow.pop %v186
    %v188 = vadd.f32 %v187, 1.0
    %v189 = vrcp.pop %v188
    %v190 = vmul.f32 1.0, %v189
    %v191 = vlaneseq
    %v192 = vshrl.u32 %v191, 7
    %v193 = vadd.s32 %v192, 8
    %v194 = vadd.s32 %v192, 16
    %v195 = vadd.s32 %v192, 24
    %v196 = vadd.s32 %v192, 32
    %v197 = vadd.s32 %v192, 40
    %v198 = vadd.s32 %v192, 48
    %v199 = vadd.s32 %v192, 56
    %v200 = vlaneseq
    %v201 = vshrl.u32 %v200, 7
    %v202 = vsub.s32 0, %v201
    %v203 = vrot.slane %v170, %v202
    %vm204 = vcmp.eq.s32.totalorder %v192, %v203
    %vm205 = vcmp.eq.s32.totalorder %v193, %v203
    %vm206 = vcmp.eq.s32.totalorder %v194, %v203
    %vm207 = vcmp.eq.s32.totalorder %v195, %v203
    %vm208 = vcmp.eq.s32.totalorder %v196, %v203
    %vm209 = vcmp.eq.s32.totalorder %v197, %v203
    %vm210 = vcmp.eq.s32.totalorder %v198, %v203
    %vm211 = vcmp.eq.s32.totalorder %v199, %v203
    %v212 = vsel %vm204, 1, 0
    %v213 = vsel %vm205, 1, 0
    %v214 = vsel %vm206, 1, 0
    %v215 = vsel %vm207, 1, 0
    %v216 = vsel %vm208, 1, 0
    %v217 = vsel %vm209, 1, 0
    %v218 = vsel %vm210, 1, 0
    %v219 = vsel %vm211, 1, 0
    %v220 = vcvt.s32.f32 %v212
    %v221 = vcvt.s32.f32 %v213
    %v222 = vcvt.s32.f32 %v214
    %v223 = vcvt.s32.f32 %v215
    %v224 = vcvt.s32.f32 %v216
    %v225 = vcvt.s32.f32 %v217
    %v226 = vcvt.s32.f32 %v218
    %v227 = vcvt.s32.f32 %v219
    %v228 = vlaneseq
    %v229 = vshrl.u32 %v228, 7
    %v230 = vsub.s32 1, %v229
    %v231 = vrot.slane %v170, %v230
    %vm232 = vcmp.eq.s32.totalorder %v192, %v231
    %vm233 = vcmp.eq.s32.totalorder %v193, %v231
    %vm234 = vcmp.eq.s32.totalorder %v194, %v231
    %vm235 = vcmp.eq.s32.totalorder %v195, %v231
    %vm236 = vcmp.eq.s32.totalorder %v196, %v231
    %vm237 = vcmp.eq.s32.totalorder %v197, %v231
    %vm238 = vcmp.eq.s32.totalorder %v198, %v231
    %vm239 = vcmp.eq.s32.totalorder %v199, %v231
    %v240 = vsel %vm232, 1, 0
    %v241 = vsel %vm233, 1, 0
    %v242 = vsel %vm234, 1, 0
    %v243 = vsel %vm235, 1, 0
    %v244 = vsel %vm236, 1, 0
    %v245 = vsel %vm237, 1, 0
    %v246 = vsel %vm238, 1, 0
    %v247 = vsel %vm239, 1, 0
    %v248 = vcvt.s32.f32 %v240
    %v249 = vcvt.s32.f32 %v241
    %v250 = vcvt.s32.f32 %v242
    %v251 = vcvt.s32.f32 %v243
    %v252 = vcvt.s32.f32 %v244
    %v253 = vcvt.s32.f32 %v245
    %v254 = vcvt.s32.f32 %v246
    %v255 = vcvt.s32.f32 %v247
    %v256 = vpack.c.bf16 %v249, %v248
    %v257 = vpack.c.bf16 %v251, %v250
    %v258 = vpack.c.bf16 %v253, %v252
    %v259 = vpack.c.bf16 %v255, %v254
    %v261 = vlaneseq
    %v262 = vshrl.u32 %v261, 7
    %v263 = vsub.s32 0, %v262
    %v264 = vrot.slane %v190, %v263
    %v266 = vmul.f32 %v264, %v220
    %v267 = vmul.f32 %v264, %v221
    %v268 = vmul.f32 %v264, %v222
    %v269 = vmul.f32 %v264, %v223
    %v270 = vmul.f32 %v264, %v224
    %v271 = vmul.f32 %v264, %v225
    %v272 = vmul.f32 %v264, %v226
    %v273 = vmul.f32 %v264, %v227
    %v274 = vpack.c.bf16 %v267, %v266
    %v275 = vpack.c.bf16 %v269, %v268
    %v276 = vpack.c.bf16 %v271, %v270
    %v277 = vpack.c.bf16 %v273, %v272
    %278 = vmatprep.subr.bf16.mxu0 0
    %279 = vmatpush1.bf16.xpose.msra.mxu0 %v274
    %280 = vmatprep.subr.bf16.mxu0 0
    %281 = vmatpush1.bf16.xpose.msra.mxu0 %v275
    %282 = vmatprep.subr.bf16.mxu0 0
    %283 = vmatpush1.bf16.xpose.msra.mxu0 %v276
    %284 = vmatprep.subr.bf16.mxu0 0
    %285 = vmatpush1.bf16.xpose.msra.mxu0 %v277
    %286 = vmatprep.subr.bf16.mxu0 0
    %287 = vmatpush1.bf16.xpose.msra.mxu0 0
    %288 = vmatprep.subr.bf16.mxu0 0
    %289 = vmatpush1.bf16.xpose.msra.mxu0 0
    %290 = vmatprep.subr.bf16.mxu0 0
    %291 = vmatpush1.bf16.xpose.msra.mxu0 0
    %292 = vmatprep.subr.bf16.mxu0 0
    %293 = vmatpush1.bf16.xpose.msra.mxu0 0
    %294 = vmatprep.subr.bf16.mxu0 0
    %295 = vmatpush1.bf16.xpose.msra.mxu0 0
    %296 = vmatprep.subr.bf16.mxu0 0
    %297 = vmatpush1.bf16.xpose.msra.mxu0 0
    %298 = vmatprep.subr.bf16.mxu0 0
    %299 = vmatpush1.bf16.xpose.msra.mxu0 0
    %300 = vmatprep.subr.bf16.mxu0 0
    %301 = vmatpush1.bf16.xpose.msra.mxu0 0
    %302 = vmatprep.subr.bf16.mxu0 0
    %303 = vmatpush1.bf16.xpose.msra.mxu0 0
    %304 = vmatprep.subr.bf16.mxu0 0
    %305 = vmatpush1.bf16.xpose.msra.mxu0 0
    %306 = vmatprep.subr.bf16.mxu0 0
    %307 = vmatpush1.bf16.xpose.msra.mxu0 0
    %308 = vmatprep.subr.bf16.mxu0 0
    %309 = vmatpush1.bf16.xpose.msra.mxu0 0
    %310 = vmatprep.mubr.bf16.mxu0 0
    %311 = vmatmul.mubr.bf16.gmra.mrb[0].mxu0 %v256
    %v312 = vpop.f32.mrb[0].mxu0
    %v313 = vadd.f32 0.0, %v312
    %v314 = vpop.f32.mrb[0].mxu0
    %v315 = vpop.f32.mrb[0].mxu0
    %v316 = vadd.f32 0.0, %v315
    %v317 = vpop.f32.mrb[0].mxu0
    %318 = vmatprep.mubr.bf16.mxu0 0
    %319 = vmatmul.mubr.bf16.gmra.mrb[0].mxu0 %v257
    %v320 = vpop.f32.mrb[0].mxu0
    %v321 = vadd.f32 0.0, %v320
    %v322 = vpop.f32.mrb[0].mxu0
    %v323 = vpop.f32.mrb[0].mxu0
    %v324 = vadd.f32 0.0, %v323
    %v325 = vpop.f32.mrb[0].mxu0
    %326 = vmatprep.mubr.bf16.mxu0 0
    %327 = vmatmul.mubr.bf16.gmra.mrb[0].mxu0 %v258
    %v328 = vpop.f32.mrb[0].mxu0
    %v329 = vadd.f32 0.0, %v328
    %v330 = vpop.f32.mrb[0].mxu0
    %v331 = vpop.f32.mrb[0].mxu0
    %v332 = vadd.f32 0.0, %v331
    %v333 = vpop.f32.mrb[0].mxu0
    %334 = vmatprep.mubr.bf16.mxu0 0
    %335 = vmatmul.mubr.bf16.gmra.mrb[0].mxu0 %v259
    %v336 = vpop.f32.mrb[0].mxu0
    %v337 = vadd.f32 0.0, %v336
    %v338 = vpop.f32.mrb[0].mxu0
    %v339 = vpop.f32.mrb[0].mxu0
    %v340 = vadd.f32 0.0, %v339
    %v341 = vpop.f32.mrb[0].mxu0
    %342 = vdwg.mxu0
    %v343 = vpack.c.bf16 %v316, %v313
    %v344 = vpack.c.bf16 %v324, %v321
    %v345 = vpack.c.bf16 %v332, %v329
    %v346 = vpack.c.bf16 %v340, %v337
    %v347 = vld [vmem:[%s0] sm:$0xff]
    %v348 = vld [vmem:[%s0 + $0x8] sm:$0xff]
    %v349 = vld [vmem:[%s0 + $0x10] sm:$0xff]
    %v350 = vld [vmem:[%s0 + $0x18] sm:$0xff]
    %v351 = vld [vmem:[%s0 + $0x20] sm:$0xff]
    %v352 = vld [vmem:[%s0 + $0x28] sm:$0xff]
    %v353 = vld [vmem:[%s0 + $0x30] sm:$0xff]
    %v354 = vld [vmem:[%s0 + $0x38] sm:$0xff]
    %v355 = vpack.c.bf16 %v348, %v347
    %v356 = vpack.c.bf16 %v350, %v349
    %v357 = vpack.c.bf16 %v352, %v351
    %v358 = vpack.c.bf16 %v354, %v353
    %v359 = vld [vmem:[%s8] sm:$0xf]
    %v362 = vunpack.c.l.s4 1983009808
    %v363 = vunpack.c.0.s8 %v362
    %v364 = vlaneseq
    %v365 = vshrl.u32 %v364, 7
    %v366 = vsub.s32 %v363, %v365
    %v367 = vrot.slane %v359, %v366
    %v368 = vcombine.high %v367, %v367
    %vm369 = vcmask 23552
    %v371 = vsel %vm369, %v355, 0
    %v374 = vsel %vm369, %v356, 0
    %v377 = vsel %vm369, %v357, 0
    %v380 = vsel %vm369, %v358, 0
    %vm382 = vcmask 1040384
    %vm383 = vcmask 1041408
    %v384 = vsel %vm382, 4294967295, 65535
    %v385 = vsel %vm383, %v384, 0
    %v387 = vand.u32 %v367, %v385
    %v390 = vand.u32 %v368, %v385
    %392 = vmatprep.subr.bf16.mxu0 %v390
    %393 = vmatpush1.bf16.msra.mxu0 %v387
    %394 = vmatprep.subr.bf16.mxu0 0
    %395 = vmatpush1.bf16.msra.mxu0 0
    %396 = vmatprep.subr.bf16.mxu0 0
    %397 = vmatpush1.bf16.msra.mxu0 0
    %398 = vmatprep.subr.bf16.mxu0 0
    %399 = vmatpush1.bf16.msra.mxu0 0
    %400 = vmatprep.subr.bf16.mxu0 0
    %401 = vmatpush1.bf16.msra.mxu0 0
    %402 = vmatprep.subr.bf16.mxu0 0
    %403 = vmatpush1.bf16.msra.mxu0 0
    %404 = vmatprep.subr.bf16.mxu0 0
    %405 = vmatpush1.bf16.msra.mxu0 0
    %406 = vmatprep.subr.bf16.mxu0 0
    %407 = vmatpush1.bf16.msra.mxu0 0
    %408 = vmatprep.subr.bf16.mxu0 0
    %409 = vmatpush1.bf16.msra.mxu0 0
    %410 = vmatprep.subr.bf16.mxu0 0
    %411 = vmatpush1.bf16.msra.mxu0 0
    %412 = vmatprep.subr.bf16.mxu0 0
    %413 = vmatpush1.bf16.msra.mxu0 0
    %414 = vmatprep.subr.bf16.mxu0 0
    %415 = vmatpush1.bf16.msra.mxu0 0
    %416 = vmatprep.subr.bf16.mxu0 0
    %417 = vmatpush1.bf16.msra.mxu0 0
    %418 = vmatprep.subr.bf16.mxu0 0
    %419 = vmatpush1.bf16.msra.mxu0 0
    %420 = vmatprep.subr.bf16.mxu0 0
    %421 = vmatpush1.bf16.msra.mxu0 0
    %422 = vmatprep.subr.bf16.mxu0 0
    %423 = vmatpush1.bf16.msra.mxu0 0
    %424 = vmatprep.mubr.bf16.mxu0 0
    %425 = vmatmul.mubr.bf16.gmra.mrb[0].mxu0 %v371
    %v426 = vpop.f32.mrb[0].mxu0
    %v427 = vadd.f32 0.0, %v426
    %v428 = vpop.f32.mrb[0].mxu0
    %v429 = vadd.f32 0.0, %v428
    %v430 = vpop.f32.mrb[0].mxu0
    %v431 = vadd.f32 0.0, %v430
    %v432 = vpop.f32.mrb[0].mxu0
    %v433 = vadd.f32 0.0, %v432
    %434 = vmatprep.mubr.bf16.mxu0 0
    %435 = vmatmul.mubr.bf16.gmra.mrb[0].mxu0 %v374
    %v436 = vpop.f32.mrb[0].mxu0
    %v437 = vadd.f32 0.0, %v436
    %v438 = vpop.f32.mrb[0].mxu0
    %v439 = vadd.f32 0.0, %v438
    %v440 = vpop.f32.mrb[0].mxu0
    %v441 = vadd.f32 0.0, %v440
    %v442 = vpop.f32.mrb[0].mxu0
    %v443 = vadd.f32 0.0, %v442
    %444 = vmatprep.mubr.bf16.mxu0 0
    %445 = vmatmul.mubr.bf16.gmra.mrb[0].mxu0 %v377
    %v446 = vpop.f32.mrb[0].mxu0
    %v447 = vadd.f32 0.0, %v446
    %v448 = vpop.f32.mrb[0].mxu0
    %v449 = vadd.f32 0.0, %v448
    %v450 = vpop.f32.mrb[0].mxu0
    %v451 = vadd.f32 0.0, %v450
    %v452 = vpop.f32.mrb[0].mxu0
    %v453 = vadd.f32 0.0, %v452
    %454 = vmatprep.mubr.bf16.mxu0 0
    %455 = vmatmul.mubr.bf16.gmra.mrb[0].mxu0 %v380
    %v456 = vpop.f32.mrb[0].mxu0
    %v457 = vadd.f32 0.0, %v456
    %v458 = vpop.f32.mrb[0].mxu0
    %v459 = vadd.f32 0.0, %v458
    %v460 = vpop.f32.mrb[0].mxu0
    %v461 = vadd.f32 0.0, %v460
    %v462 = vpop.f32.mrb[0].mxu0
    %v463 = vadd.f32 0.0, %v462
    %464 = vdwg.mxu0
    %v465 = vld [vmem:[#allocation5] sm:$0x1]
    %v466 = vpack.c.bf16 %v433, %v429
    %v467 = vpack.c.bf16 %v443, %v439
    %v468 = vpack.c.bf16 %v453, %v449
    %v469 = vpack.c.bf16 %v463, %v459
    %vm470 = vcmask 523264
    %v472 = vsel %vm470, %v343, 0
    %v475 = vsel %vm470, %v344, 0
    %v478 = vsel %vm470, %v345, 0
    %v481 = vsel %vm470, %v346, 0
    %483 = vmatprep.subr.bf16.mxu0 0
    %484 = vmatpush1.bf16.msra.mxu0 %v466
    %485 = vmatprep.subr.bf16.mxu0 0
    %486 = vmatpush1.bf16.msra.mxu0 %v467
    %487 = vmatprep.subr.bf16.mxu0 0
    %488 = vmatpush1.bf16.msra.mxu0 %v468
    %489 = vmatprep.subr.bf16.mxu0 0
    %490 = vmatpush1.bf16.msra.mxu0 %v469
    %491 = vmatprep.subr.bf16.mxu0 0
    %492 = vmatpush1.bf16.msra.mxu0 0
    %493 = vmatprep.subr.bf16.mxu0 0
    %494 = vmatpush1.bf16.msra.mxu0 0
    %495 = vmatprep.subr.bf16.mxu0 0
    %496 = vmatpush1.bf16.msra.mxu0 0
    %497 = vmatprep.subr.bf16.mxu0 0
    %498 = vmatpush1.bf16.msra.mxu0 0
    %499 = vmatprep.subr.bf16.mxu0 0
    %500 = vmatpush1.bf16.msra.mxu0 0
    %501 = vmatprep.subr.bf16.mxu0 0
    %502 = vmatpush1.bf16.msra.mxu0 0
    %503 = vmatprep.subr.bf16.mxu0 0
    %504 = vmatpush1.bf16.msra.mxu0 0
    %505 = vmatprep.subr.bf16.mxu0 0
    %506 = vmatpush1.bf16.msra.mxu0 0
    %507 = vmatprep.subr.bf16.mxu0 0
    %508 = vmatpush1.bf16.msra.mxu0 0
    %509 = vmatprep.subr.bf16.mxu0 0
    %510 = vmatpush1.bf16.msra.mxu0 0
    %511 = vmatprep.subr.bf16.mxu0 0
    %512 = vmatpush1.bf16.msra.mxu0 0
    %513 = vmatprep.subr.bf16.mxu0 0
    %514 = vmatpush1.bf16.msra.mxu0 0
    %515 = vmatprep.mubr.bf16.mxu0 0
    %516 = vmatmul.mubr.bf16.gmra.mrb[0].mxu0 %v472
    %v517 = vpop.f32.mrb[0].mxu0
    %v518 = vadd.f32 0.0, %v517
    %v519 = vpop.f32.mrb[0].mxu0
    %v520 = vpop.f32.mrb[0].mxu0
    %v521 = vadd.f32 0.0, %v520
    %v522 = vpop.f32.mrb[0].mxu0
    %523 = vmatprep.mubr.bf16.mxu0 0
    %524 = vmatmul.mubr.bf16.gmra.mrb[0].mxu0 %v475
    %v525 = vpop.f32.mrb[0].mxu0
    %v526 = vadd.f32 0.0, %v525
    %v527 = vpop.f32.mrb[0].mxu0
    %v528 = vpop.f32.mrb[0].mxu0
    %v529 = vadd.f32 0.0, %v528
    %v530 = vpop.f32.mrb[0].mxu0
    %531 = vmatprep.mubr.bf16.mxu0 0
    %532 = vmatmul.mubr.bf16.gmra.mrb[0].mxu0 %v478
    %v533 = vpop.f32.mrb[0].mxu0
    %v534 = vadd.f32 0.0, %v533
    %v535 = vpop.f32.mrb[0].mxu0
    %v536 = vpop.f32.mrb[0].mxu0
    %v537 = vadd.f32 0.0, %v536
    %v538 = vpop.f32.mrb[0].mxu0
    %539 = vmatprep.mubr.bf16.mxu0 0
    %540 = vmatmul.mubr.bf16.gmra.mrb[0].mxu0 %v481
    %v541 = vpop.f32.mrb[0].mxu0
    %v542 = vadd.f32 0.0, %v541
    %v543 = vpop.f32.mrb[0].mxu0
    %v544 = vpop.f32.mrb[0].mxu0
    %v545 = vadd.f32 0.0, %v544
    %v546 = vpop.f32.mrb[0].mxu0
    %547 = vdwg.mxu0
    %v548 = vadd.f32 %v427, %v518
    %v549 = vadd.f32 %v431, %v521
    %v550 = vadd.f32 %v437, %v526
    %v551 = vadd.f32 %v441, %v529
    %v552 = vadd.f32 %v447, %v534
    %v553 = vadd.f32 %v451, %v537
    %v554 = vadd.f32 %v457, %v542
    %v555 = vadd.f32 %v461, %v545
    %v557 = vlaneseq
    %v558 = vshrl.u32 %v557, 7
    %v559 = vsub.s32 0, %v558
    %v560 = vrot.slane %v465, %v559
    %v562 = vadd.f32 %v548, %v560
    %v563 = vadd.f32 %v549, %v560
    %v564 = vadd.f32 %v550, %v560
    %v565 = vadd.f32 %v551, %v560
    %v566 = vadd.f32 %v552, %v560
    %v567 = vadd.f32 %v553, %v560
    %v568 = vadd.f32 %v554, %v560
    %v569 = vadd.f32 %v555, %v560
    %v570 = vmax.f32 %v562, 0.0
    %v571 = vmax.f32 %v563, 0.0
    %v572 = vmax.f32 %v564, 0.0
    %v573 = vmax.f32 %v565, 0.0
    %v574 = vmax.f32 %v566, 0.0
    %v575 = vmax.f32 %v567, 0.0
    %v576 = vmax.f32 %v568, 0.0
    %v577 = vmax.f32 %v569, 0.0
    %v578 = vpack.c.bf16 %v571, %v570
    %v579 = vpack.c.bf16 %v573, %v572
    %v580 = vpack.c.bf16 %v575, %v574
    %v581 = vpack.c.bf16 %v577, %v576
    %v582 = vld [vmem:[#allocation2] sm:$0xff]
    %v583 = vld [vmem:[#allocation2 + $0x8] sm:$0xff]
    %v584 = vld [vmem:[#allocation2 + $0x10] sm:$0xff]
    %v585 = vld [vmem:[#allocation2 + $0x18] sm:$0xff]
    %v586 = vld [vmem:[#allocation2 + $0x20] sm:$0xff]
    %v587 = vld [vmem:[#allocation2 + $0x28] sm:$0xff]
    %v588 = vld [vmem:[#allocation2 + $0x30] sm:$0xff]
    %v589 = vld [vmem:[#allocation2 + $0x38] sm:$0xff]
    %v590 = vld [vmem:[#allocation2 + $0x40] sm:$0xff]
    %v591 = vld [vmem:[#allocation2 + $0x48] sm:$0xff]
    %v592 = vld [vmem:[#allocation2 + $0x50] sm:$0xff]
    %v593 = vld [vmem:[#allocation2 + $0x58] sm:$0xff]
    %v594 = vld [vmem:[#allocation2 + $0x60] sm:$0xff]
    %v595 = vld [vmem:[#allocation2 + $0x68] sm:$0xff]
    %v596 = vld [vmem:[#allocation2 + $0x70] sm:$0xff]
    %v597 = vld [vmem:[#allocation2 + $0x78] sm:$0xff]
    %v614 = vunpack.c.l.b16 %v582
    %v615 = vunpack.c.h.b16 %v582
    %v616 = vunpack.c.l.b16 %v583
    %v617 = vunpack.c.h.b16 %v583
    %v618 = vunpack.c.l.b16 %v584
    %v619 = vunpack.c.h.b16 %v584
    %v620 = vunpack.c.l.b16 %v585
    %v621 = vunpack.c.h.b16 %v585
    %v622 = vunpack.c.l.b16 %v586
    %v623 = vunpack.c.h.b16 %v586
    %v624 = vunpack.c.l.b16 %v587
    %v625 = vunpack.c.h.b16 %v587
    %v626 = vunpack.c.l.b16 %v588
    %v627 = vunpack.c.h.b16 %v588
    %v628 = vunpack.c.l.b16 %v589
    %v629 = vunpack.c.h.b16 %v589
    %v630 = vunpack.c.l.b16 %v590
    %v631 = vunpack.c.h.b16 %v590
    %v632 = vunpack.c.l.b16 %v591
    %v633 = vunpack.c.h.b16 %v591
    %v634 = vunpack.c.l.b16 %v592
    %v635 = vunpack.c.h.b16 %v592
    %v636 = vunpack.c.l.b16 %v593
    %v637 = vunpack.c.h.b16 %v593
    %v638 = vunpack.c.l.b16 %v594
    %v639 = vunpack.c.h.b16 %v594
    %v640 = vunpack.c.l.b16 %v595
    %v641 = vunpack.c.h.b16 %v595
    %v642 = vunpack.c.l.b16 %v596
    %v643 = vunpack.c.h.b16 %v596
    %v644 = vunpack.c.l.b16 %v597
    %v645 = vunpack.c.h.b16 %v597
    %v646 = vpack.c.b16 %v616, %v614
    %v647 = vpack.c.b16 %v617, %v615
    %v648 = vpack.c.b16 %v620, %v618
    %v649 = vpack.c.b16 %v621, %v619
    %v650 = vpack.c.b16 %v624, %v622
    %v651 = vpack.c.b16 %v625, %v623
    %v652 = vpack.c.b16 %v628, %v626
    %v653 = vpack.c.b16 %v629, %v627
    %v654 = vpack.c.b16 %v632, %v630
    %v655 = vpack.c.b16 %v633, %v631
    %v656 = vpack.c.b16 %v636, %v634
    %v657 = vpack.c.b16 %v637, %v635
    %v658 = vpack.c.b16 %v640, %v638
    %v659 = vpack.c.b16 %v641, %v639
    %v660 = vpack.c.b16 %v644, %v642
    %v661 = vpack.c.b16 %v645, %v643
    %678 = vmatprep.subr.bf16.mxu0 %v647
    %679 = vmatpush1.bf16.msra.mxu0 %v646
    %680 = vmatprep.subr.bf16.mxu0 %v649
    %681 = vmatpush1.bf16.msra.mxu0 %v648
    %682 = vmatprep.subr.bf16.mxu0 %v651
    %683 = vmatpush1.bf16.msra.mxu0 %v650
    %684 = vmatprep.subr.bf16.mxu0 %v653
    %685 = vmatpush1.bf16.msra.mxu0 %v652
    %686 = vmatprep.subr.bf16.mxu0 %v655
    %687 = vmatpush1.bf16.msra.mxu0 %v654
    %688 = vmatprep.subr.bf16.mxu0 %v657
    %689 = vmatpush1.bf16.msra.mxu0 %v656
    %690 = vmatprep.subr.bf16.mxu0 %v659
    %691 = vmatpush1.bf16.msra.mxu0 %v658
    %692 = vmatprep.subr.bf16.mxu0 %v661
    %693 = vmatpush1.bf16.msra.mxu0 %v660
    %694 = vmatprep.subr.bf16.mxu0 0
    %695 = vmatpush1.bf16.msra.mxu0 0
    %696 = vmatprep.subr.bf16.mxu0 0
    %697 = vmatpush1.bf16.msra.mxu0 0
    %698 = vmatprep.subr.bf16.mxu0 0
    %699 = vmatpush1.bf16.msra.mxu0 0
    %700 = vmatprep.subr.bf16.mxu0 0
    %701 = vmatpush1.bf16.msra.mxu0 0
    %702 = vmatprep.subr.bf16.mxu0 0
    %703 = vmatpush1.bf16.msra.mxu0 0
    %704 = vmatprep.subr.bf16.mxu0 0
    %705 = vmatpush1.bf16.msra.mxu0 0
    %706 = vmatprep.subr.bf16.mxu0 0
    %707 = vmatpush1.bf16.msra.mxu0 0
    %708 = vmatprep.subr.bf16.mxu0 0
    %709 = vmatpush1.bf16.msra.mxu0 0
    %710 = vmatprep.mubr.bf16.mxu0 0
    %711 = vmatmul.mubr.bf16.gmra.mrb[0].mxu0 %v578
    %v712 = vpop.f32.mrb[0].mxu0
    %v713 = vadd.f32 0.0, %v712
    %v714 = vpop.f32.mrb[0].mxu0
    %v715 = vadd.f32 0.0, %v714
    %v716 = vpop.f32.mrb[0].mxu0
    %v717 = vadd.f32 0.0, %v716
    %v718 = vpop.f32.mrb[0].mxu0
    %v719 = vadd.f32 0.0, %v718
    %720 = vmatprep.mubr.bf16.mxu0 0
    %721 = vmatmul.mubr.bf16.gmra.mrb[0].mxu0 %v579
    %v722 = vpop.f32.mrb[0].mxu0
    %v723 = vadd.f32 0.0, %v722
    %v724 = vpop.f32.mrb[0].mxu0
    %v725 = vadd.f32 0.0, %v724
    %v726 = vpop.f32.mrb[0].mxu0
    %v727 = vadd.f32 0.0, %v726
    %v728 = vpop.f32.mrb[0].mxu0
    %v729 = vadd.f32 0.0, %v728
    %730 = vmatprep.mubr.bf16.mxu0 0
    %731 = vmatmul.mubr.bf16.gmra.mrb[0].mxu0 %v580
    %v732 = vpop.f32.mrb[0].mxu0
    %v733 = vadd.f32 0.0, %v732
    %v734 = vpop.f32.mrb[0].mxu0
    %v735 = vadd.f32 0.0, %v734
    %v736 = vpop.f32.mrb[0].mxu0
    %v737 = vadd.f32 0.0, %v736
    %v738 = vpop.f32.mrb[0].mxu0
    %v739 = vadd.f32 0.0, %v738
    %740 = vmatprep.mubr.bf16.mxu0 0
    %741 = vmatmul.mubr.bf16.gmra.mrb[0].mxu0 %v581
    %v742 = vpop.f32.mrb[0].mxu0
    %v743 = vadd.f32 0.0, %v742
    %v744 = vpop.f32.mrb[0].mxu0
    %v745 = vadd.f32 0.0, %v744
    %v746 = vpop.f32.mrb[0].mxu0
    %v747 = vadd.f32 0.0, %v746
    %v748 = vpop.f32.mrb[0].mxu0
    %v749 = vadd.f32 0.0, %v748
    %750 = vdwg.mxu0
    %s751 = scalar_lea.vmem [#allocation5], 1
    %v752 = vld [vmem:[%s751] sm:$0x1]
    %v753 = vpack.c.bf16 %v719, %v715
    %v754 = vpack.c.bf16 %v729, %v725
    %v755 = vpack.c.bf16 %v739, %v735
    %v756 = vpack.c.bf16 %v749, %v745
    %757 = vmatprep.subr.bf16.mxu0 0
    %758 = vmatpush1.bf16.msra.mxu0 %v753
    %759 = vmatprep.subr.bf16.mxu0 0
    %760 = vmatpush1.bf16.msra.mxu0 %v754
    %761 = vmatprep.subr.bf16.mxu0 0
    %762 = vmatpush1.bf16.msra.mxu0 %v755
    %763 = vmatprep.subr.bf16.mxu0 0
    %764 = vmatpush1.bf16.msra.mxu0 %v756
    %765 = vmatprep.subr.bf16.mxu0 0
    %766 = vmatpush1.bf16.msra.mxu0 0
    %767 = vmatprep.subr.bf16.mxu0 0
    %768 = vmatpush1.bf16.msra.mxu0 0
    %769 = vmatprep.subr.bf16.mxu0 0
    %770 = vmatpush1.bf16.msra.mxu0 0
    %771 = vmatprep.subr.bf16.mxu0 0
    %772 = vmatpush1.bf16.msra.mxu0 0
    %773 = vmatprep.subr.bf16.mxu0 0
    %774 = vmatpush1.bf16.msra.mxu0 0
    %775 = vmatprep.subr.bf16.mxu0 0
    %776 = vmatpush1.bf16.msra.mxu0 0
    %777 = vmatprep.subr.bf16.mxu0 0
    %778 = vmatpush1.bf16.msra.mxu0 0
    %779 = vmatprep.subr.bf16.mxu0 0
    %780 = vmatpush1.bf16.msra.mxu0 0
    %781 = vmatprep.subr.bf16.mxu0 0
    %782 = vmatpush1.bf16.msra.mxu0 0
    %783 = vmatprep.subr.bf16.mxu0 0
    %784 = vmatpush1.bf16.msra.mxu0 0
    %785 = vmatprep.subr.bf16.mxu0 0
    %786 = vmatpush1.bf16.msra.mxu0 0
    %787 = vmatprep.subr.bf16.mxu0 0
    %788 = vmatpush1.bf16.msra.mxu0 0
    %789 = vmatprep.mubr.bf16.mxu0 0
    %790 = vmatmul.mubr.bf16.gmra.mrb[0].mxu0 %v472
    %v791 = vpop.f32.mrb[0].mxu0
    %v792 = vadd.f32 0.0, %v791
    %v793 = vpop.f32.mrb[0].mxu0
    %v794 = vpop.f32.mrb[0].mxu0
    %v795 = vadd.f32 0.0, %v794
    %v796 = vpop.f32.mrb[0].mxu0
    %797 = vmatprep.mubr.bf16.mxu0 0
    %798 = vmatmul.mubr.bf16.gmra.mrb[0].mxu0 %v475
    %v799 = vpop.f32.mrb[0].mxu0
    %v800 = vadd.f32 0.0, %v799
    %v801 = vpop.f32.mrb[0].mxu0
    %v802 = vpop.f32.mrb[0].mxu0
    %v803 = vadd.f32 0.0, %v802
    %v804 = vpop.f32.mrb[0].mxu0
    %805 = vmatprep.mubr.bf16.mxu0 0
    %806 = vmatmul.mubr.bf16.gmra.mrb[0].mxu0 %v478
    %v807 = vpop.f32.mrb[0].mxu0
    %v808 = vadd.f32 0.0, %v807
    %v809 = vpop.f32.mrb[0].mxu0
    %v810 = vpop.f32.mrb[0].mxu0
    %v811 = vadd.f32 0.0, %v810
    %v812 = vpop.f32.mrb[0].mxu0
    %813 = vmatprep.mubr.bf16.mxu0 0
    %814 = vmatmul.mubr.bf16.gmra.mrb[0].mxu0 %v481
    %v815 = vpop.f32.mrb[0].mxu0
    %v816 = vadd.f32 0.0, %v815
    %v817 = vpop.f32.mrb[0].mxu0
    %v818 = vpop.f32.mrb[0].mxu0
    %v819 = vadd.f32 0.0, %v818
    %v820 = vpop.f32.mrb[0].mxu0
    %821 = vdwg.mxu0
    %v822 = vadd.f32 %v713, %v792
    %v823 = vadd.f32 %v717, %v795
    %v824 = vadd.f32 %v723, %v800
    %v825 = vadd.f32 %v727, %v803
    %v826 = vadd.f32 %v733, %v808
    %v827 = vadd.f32 %v737, %v811
    %v828 = vadd.f32 %v743, %v816
    %v829 = vadd.f32 %v747, %v819
    %v831 = vlaneseq
    %v832 = vshrl.u32 %v831, 7
    %v833 = vsub.s32 0, %v832
    %v834 = vrot.slane %v752, %v833
    %v836 = vadd.f32 %v822, %v834
    %v837 = vadd.f32 %v823, %v834
    %v838 = vadd.f32 %v824, %v834
    %v839 = vadd.f32 %v825, %v834
    %v840 = vadd.f32 %v826, %v834
    %v841 = vadd.f32 %v827, %v834
    %v842 = vadd.f32 %v828, %v834
    %v843 = vadd.f32 %v829, %v834
    %v844 = vmax.f32 %v836, 0.0
    %v845 = vmax.f32 %v837, 0.0
    %v846 = vmax.f32 %v838, 0.0
    %v847 = vmax.f32 %v839, 0.0
    %v848 = vmax.f32 %v840, 0.0
    %v849 = vmax.f32 %v841, 0.0
    %v850 = vmax.f32 %v842, 0.0
    %v851 = vmax.f32 %v843, 0.0
    %v852 = vrot.slane %v844, 4
    %v853 = vmax.f32 %v844, %v852
    %v854 = vrot.slane %v853, 2
    %v855 = vmax.f32 %v853, %v854
    %v856 = vrot.slane %v855, 1
    %v857 = vmax.f32 %v855, %v856
    %v858 = vrot.slane %v845, 4
    %v859 = vmax.f32 %v845, %v858
    %v860 = vrot.slane %v859, 2
    %v861 = vmax.f32 %v859, %v860
    %v862 = vrot.slane %v861, 1
    %v863 = vmax.f32 %v861, %v862
    %v864 = vrot.slane %v846, 4
    %v865 = vmax.f32 %v846, %v864
    %v866 = vrot.slane %v865, 2
    %v867 = vmax.f32 %v865, %v866
    %v868 = vrot.slane %v867, 1
    %v869 = vmax.f32 %v867, %v868
    %v870 = vrot.slane %v847, 4
    %v871 = vmax.f32 %v847, %v870
    %v872 = vrot.slane %v871, 2
    %v873 = vmax.f32 %v871, %v872
    %v874 = vrot.slane %v873, 1
    %v875 = vmax.f32 %v873, %v874
    %v876 = vrot.slane %v848, 4
    %v877 = vmax.f32 %v848, %v876
    %v878 = vrot.slane %v877, 2
    %v879 = vmax.f32 %v877, %v878
    %v880 = vrot.slane %v879, 1
    %v881 = vmax.f32 %v879, %v880
    %v882 = vrot.slane %v849, 4
    %v883 = vmax.f32 %v849, %v882
    %v884 = vrot.slane %v883, 2
    %v885 = vmax.f32 %v883, %v884
    %v886 = vrot.slane %v885, 1
    %v887 = vmax.f32 %v885, %v886
    %v888 = vrot.slane %v850, 4
    %v889 = vmax.f32 %v850, %v888
    %v890 = vrot.slane %v889, 2
    %v891 = vmax.f32 %v889, %v890
    %v892 = vrot.slane %v891, 1
    %v893 = vmax.f32 %v891, %v892
    %v894 = vrot.slane %v851, 4
    %v895 = vmax.f32 %v851, %v894
    %v896 = vrot.slane %v895, 2
    %v897 = vmax.f32 %v895, %v896
    %v898 = vrot.slane %v897, 1
    %v899 = vmax.f32 %v897, %v898
    %v900 = vld [vmem:[%s5] sm:$0xf]
    %v901 = vld [vmem:[%s6] sm:$0x3]
    %v902 = vld [vmem:[%s7] sm:$0x1f]
    %904 = vset.pattern.permute.xlu0 0
    %905 = vperm.xlu0 %904, %v902
    %v906 = vpop.permute.xlu0 %905
    %v908 = vmul.f32 %v900, %v906
    %vm909 = vcmask 125952
    %v910 = vsel %vm909, %v908, 0.0
    %v911 = vrot.slane %v910, 4
    %v912 = vadd.f32 %v910, %v911
    %v913 = vrot.slane %v912, 2
    %v914 = vadd.f32 %v912, %v913
    %v915 = vrot.slane %v914, 1
    %v916 = vadd.f32 %v914, %v915
    %v917 = vadd.f32 %v916, %v906
    %v918 = vsub.f32 0.0, %v917
    %v919 = vmul.f32 %v918, 1.442695
    %v920 = vpow.pop %v919
    %v921 = vadd.f32 %v920, 1.0
    %v922 = vrcp.pop %v921
    %v923 = vmul.f32 1.0, %v922
    %v924 = vlaneseq
    %v925 = vshrl.u32 %v924, 7
    %v926 = vsub.s32 0, %v925
    %v927 = vrot.slane %v901, %v926
    %vm928 = vcmp.eq.s32.totalorder %v192, %v927
    %v929 = vsel %vm928, 1, 0
    %v930 = vcvt.s32.f32 %v929
    %v931 = vlaneseq
    %v932 = vshrl.u32 %v931, 7
    %v933 = vsub.s32 1, %v932
    %v934 = vrot.slane %v901, %v933
    %vm935 = vcmp.eq.s32.totalorder %v192, %v934
    %v936 = vsel %vm935, 1, 0
    %v937 = vcvt.s32.f32 %v936
    %v938 = vpack.c.bf16 %v937, %v937
    %v939 = vlaneseq
    %v940 = vshrl.u32 %v939, 7
    %v941 = vsub.s32 4, %v940
    %v942 = vrot.slane %v923, %v941
    %v943 = vmul.f32 %v942, %v930
    %v944 = vpack.c.bf16 %v943, %v943
    %vm945 = vcmask 130048
    %v947 = vsel %vm945, %v938, 0
    %v950 = vsel %vm945, %v944, 0
    %952 = vmatprep.subr.bf16.mxu0 0
    %953 = vmatpush1.bf16.xpose.msra.mxu0 %v950
    %954 = vmatprep.subr.bf16.mxu0 0
    %955 = vmatpush1.bf16.xpose.msra.mxu0 0
    %956 = vmatprep.subr.bf16.mxu0 0
    %957 = vmatpush1.bf16.xpose.msra.mxu0 0
    %958 = vmatprep.subr.bf16.mxu0 0
    %959 = vmatpush1.bf16.xpose.msra.mxu0 0
    %960 = vmatprep.subr.bf16.mxu0 0
    %961 = vmatpush1.bf16.xpose.msra.mxu0 0
    %962 = vmatprep.subr.bf16.mxu0 0
    %963 = vmatpush1.bf16.xpose.msra.mxu0 0
    %964 = vmatprep.subr.bf16.mxu0 0
    %965 = vmatpush1.bf16.xpose.msra.mxu0 0
    %966 = vmatprep.subr.bf16.mxu0 0
    %967 = vmatpush1.bf16.xpose.msra.mxu0 0
    %968 = vmatprep.subr.bf16.mxu0 0
    %969 = vmatpush1.bf16.xpose.msra.mxu0 0
    %970 = vmatprep.subr.bf16.mxu0 0
    %971 = vmatpush1.bf16.xpose.msra.mxu0 0
    %972 = vmatprep.subr.bf16.mxu0 0
    %973 = vmatpush1.bf16.xpose.msra.mxu0 0
    %974 = vmatprep.subr.bf16.mxu0 0
    %975 = vmatpush1.bf16.xpose.msra.mxu0 0
    %976 = vmatprep.subr.bf16.mxu0 0
    %977 = vmatpush1.bf16.xpose.msra.mxu0 0
    %978 = vmatprep.subr.bf16.mxu0 0
    %979 = vmatpush1.bf16.xpose.msra.mxu0 0
    %980 = vmatprep.subr.bf16.mxu0 0
    %981 = vmatpush1.bf16.xpose.msra.mxu0 0
    %982 = vmatprep.subr.bf16.mxu0 0
    %983 = vmatpush1.bf16.xpose.msra.mxu0 0
    %984 = vmatprep.mubr.bf16.mxu0 0
    %985 = vmatmul.mubr.bf16.gmra.mrb[0].mxu0 %v947
    %v986 = vpop.f32.mrb[0].mxu0
    %v987 = vadd.f32 0.0, %v986
    %v988 = vpop.f32.mrb[0].mxu0
    %v989 = vpop.f32.mrb[0].mxu0
    %v990 = vpop.f32.mrb[0].mxu0
    %991 = vdwg.mxu0
    %v992 = vpack.c.bf16 %v987, %v987
    %v993 = vpack.c.bf16 %v857, %v857
    %v994 = vpack.c.bf16 %v863, %v863
    %v995 = vpack.c.bf16 %v869, %v869
    %v996 = vpack.c.bf16 %v875, %v875
    %v997 = vpack.c.bf16 %v881, %v881
    %v998 = vpack.c.bf16 %v887, %v887
    %v999 = vpack.c.bf16 %v893, %v893
    %v1000 = vpack.c.bf16 %v899, %v899
    %v1001 = vld [vmem:[%s11] sm:$0xff]
    %v1002 = vld [vmem:[%s11 + $0x8] sm:$0xff]
    %v1003 = vld [vmem:[%s11 + $0x10] sm:$0xff]
    %v1004 = vld [vmem:[%s11 + $0x18] sm:$0xff]
    %v1005 = vld [vmem:[%s11 + $0x20] sm:$0xff]
    %v1006 = vld [vmem:[%s11 + $0x28] sm:$0xff]
    %v1007 = vld [vmem:[%s11 + $0x30] sm:$0xff]
    %v1008 = vld [vmem:[%s11 + $0x38] sm:$0xff]
    %v1009 = vld [vmem:[%s11 + $0x40] sm:$0xff]
    %v1010 = vld [vmem:[%s11 + $0x48] sm:$0xff]
    %v1011 = vld [vmem:[%s11 + $0x50] sm:$0xff]
    %v1012 = vld [vmem:[%s11 + $0x58] sm:$0xff]
    %v1013 = vld [vmem:[%s11 + $0x60] sm:$0xff]
    %v1014 = vld [vmem:[%s11 + $0x68] sm:$0xff]
    %v1015 = vld [vmem:[%s11 + $0x70] sm:$0xff]
    %v1016 = vld [vmem:[%s11 + $0x78] sm:$0xff]
    %v1017 = vld [vmem:[%s1] sm:$0xff]
    %v1018 = vpack.c.bf16 %v1017, %v1017
    %v1019 = vld [vmem:[%s12] sm:$0xf]
    %v1022 = vunpack.c.l.s4 1983009808
    %v1023 = vunpack.c.0.s8 %v1022
    %v1024 = vlaneseq
    %v1025 = vshrl.u32 %v1024, 7
    %v1026 = vsub.s32 %v1023, %v1025
    %v1027 = vrot.slane %v1019, %v1026
    %v1028 = vcombine.high %v1027, %v1027
    %v1030 = vsel %vm369, %v1018, 0
    %v1033 = vand.u32 %v1027, %v385
    %v1036 = vand.u32 %v1028, %v385
    %1038 = vmatprep.subr.bf16.mxu0 %v1036
    %1039 = vmatpush1.bf16.msra.mxu0 %v1033
    %1040 = vmatprep.subr.bf16.mxu0 0
    %1041 = vmatpush1.bf16.msra.mxu0 0
    %1042 = vmatprep.subr.bf16.mxu0 0
    %1043 = vmatpush1.bf16.msra.mxu0 0
    %1044 = vmatprep.subr.bf16.mxu0 0
    %1045 = vmatpush1.bf16.msra.mxu0 0
    %1046 = vmatprep.subr.bf16.mxu0 0
    %1047 = vmatpush1.bf16.msra.mxu0 0
    %1048 = vmatprep.subr.bf16.mxu0 0
    %1049 = vmatpush1.bf16.msra.mxu0 0
    %1050 = vmatprep.subr.bf16.mxu0 0
    %1051 = vmatpush1.bf16.msra.mxu0 0
    %1052 = vmatprep.subr.bf16.mxu0 0
    %1053 = vmatpush1.bf16.msra.mxu0 0
    %1054 = vmatprep.subr.bf16.mxu0 0
    %1055 = vmatpush1.bf16.msra.mxu0 0
    %1056 = vmatprep.subr.bf16.mxu0 0
    %1057 = vmatpush1.bf16.msra.mxu0 0
    %1058 = vmatprep.subr.bf16.mxu0 0
    %1059 = vmatpush1.bf16.msra.mxu0 0
    %1060 = vmatprep.subr.bf16.mxu0 0
    %1061 = vmatpush1.bf16.msra.mxu0 0
    %1062 = vmatprep.subr.bf16.mxu0 0
    %1063 = vmatpush1.bf16.msra.mxu0 0
    %1064 = vmatprep.subr.bf16.mxu0 0
    %1065 = vmatpush1.bf16.msra.mxu0 0
    %1066 = vmatprep.subr.bf16.mxu0 0
    %1067 = vmatpush1.bf16.msra.mxu0 0
    %1068 = vmatprep.subr.bf16.mxu0 0
    %1069 = vmatpush1.bf16.msra.mxu0 0
    %1070 = vmatprep.mubr.bf16.mxu0 0
    %1071 = vmatmul.mubr.bf16.gmra.mrb[0].mxu0 %v1030
    %v1072 = vpop.f32.mrb[0].mxu0
    %v1073 = vadd.f32 0.0, %v1072
    %v1074 = vpop.f32.mrb[0].mxu0
    %v1075 = vadd.f32 0.0, %v1074
    %v1076 = vpop.f32.mrb[0].mxu0
    %v1077 = vpop.f32.mrb[0].mxu0
    %1078 = vdwg.mxu0
    %v1087 = vunpack.c.l.b16 %v993
    %v1088 = vunpack.c.l.b16 %v994
    %v1089 = vunpack.c.l.b16 %v995
    %v1090 = vunpack.c.l.b16 %v996
    %v1091 = vunpack.c.l.b16 %v997
    %v1092 = vunpack.c.l.b16 %v998
    %v1093 = vunpack.c.l.b16 %v999
    %v1094 = vunpack.c.l.b16 %v1000
    %vm1095 = vcmask 1041409
    %v1096 = vsel %vm1095, %v1088, %v1087
    %vm1097 = vcmask 1042434
    %v1098 = vsel %vm1097, %v1089, %v1096
    %vm1099 = vcmask 1043459
    %v1100 = vsel %vm1099, %v1090, %v1098
    %vm1101 = vcmask 1044484
    %v1102 = vsel %vm1101, %v1091, %v1100
    %vm1103 = vcmask 1045509
    %v1104 = vsel %vm1103, %v1092, %v1102
    %vm1105 = vcmask 1046534
    %v1106 = vsel %vm1105, %v1093, %v1104
    %vm1107 = vcmask 1047559
    %v1108 = vsel %vm1107, %v1094, %v1106
    %v1109 = vpack.c.b16 %v1108, %v1108
    %v1127 = vunpack.c.l.b16 %v1001
    %v1128 = vunpack.c.h.b16 %v1001
    %v1129 = vunpack.c.l.b16 %v1002
    %v1130 = vunpack.c.h.b16 %v1002
    %v1131 = vunpack.c.l.b16 %v1003
    %v1132 = vunpack.c.h.b16 %v1003
    %v1133 = vunpack.c.l.b16 %v1004
    %v1134 = vunpack.c.h.b16 %v1004
    %v1135 = vunpack.c.l.b16 %v1005
    %v1136 = vunpack.c.h.b16 %v1005
    %v1137 = vunpack.c.l.b16 %v1006
    %v1138 = vunpack.c.h.b16 %v1006
    %v1139 = vunpack.c.l.b16 %v1007
    %v1140 = vunpack.c.h.b16 %v1007
    %v1141 = vunpack.c.l.b16 %v1008
    %v1142 = vunpack.c.h.b16 %v1008
    %v1143 = vunpack.c.l.b16 %v1009
    %v1144 = vunpack.c.h.b16 %v1009
    %v1145 = vunpack.c.l.b16 %v1010
    %v1146 = vunpack.c.h.b16 %v1010
    %v1147 = vunpack.c.l.b16 %v1011
    %v1148 = vunpack.c.h.b16 %v1011
    %v1149 = vunpack.c.l.b16 %v1012
    %v1150 = vunpack.c.h.b16 %v1012
    %v1151 = vunpack.c.l.b16 %v1013
    %v1152 = vunpack.c.h.b16 %v1013
    %v1153 = vunpack.c.l.b16 %v1014
    %v1154 = vunpack.c.h.b16 %v1014
    %v1155 = vunpack.c.l.b16 %v1015
    %v1156 = vunpack.c.h.b16 %v1015
    %v1157 = vunpack.c.l.b16 %v1016
    %v1158 = vunpack.c.h.b16 %v1016
    %v1159 = vpack.c.b16 %v1129, %v1127
    %v1160 = vpack.c.b16 %v1130, %v1128
    %v1161 = vpack.c.b16 %v1133, %v1131
    %v1162 = vpack.c.b16 %v1134, %v1132
    %v1163 = vpack.c.b16 %v1137, %v1135
    %v1164 = vpack.c.b16 %v1138, %v1136
    %v1165 = vpack.c.b16 %v1141, %v1139
    %v1166 = vpack.c.b16 %v1142, %v1140
    %v1167 = vpack.c.b16 %v1145, %v1143
    %v1168 = vpack.c.b16 %v1146, %v1144
    %v1169 = vpack.c.b16 %v1149, %v1147
    %v1170 = vpack.c.b16 %v1150, %v1148
    %v1171 = vpack.c.b16 %v1153, %v1151
    %v1172 = vpack.c.b16 %v1154, %v1152
    %v1173 = vpack.c.b16 %v1157, %v1155
    %v1174 = vpack.c.b16 %v1158, %v1156
    %1191 = vmatprep.subr.bf16.mxu0 %v1160
    %1192 = vmatpush1.bf16.msra.mxu0 %v1159
    %1193 = vmatprep.subr.bf16.mxu0 %v1162
    %1194 = vmatpush1.bf16.msra.mxu0 %v1161
    %1195 = vmatprep.subr.bf16.mxu0 %v1164
    %1196 = vmatpush1.bf16.msra.mxu0 %v1163
    %1197 = vmatprep.subr.bf16.mxu0 %v1166
    %1198 = vmatpush1.bf16.msra.mxu0 %v1165
    %1199 = vmatprep.subr.bf16.mxu0 %v1168
    %1200 = vmatpush1.bf16.msra.mxu0 %v1167
    %1201 = vmatprep.subr.bf16.mxu0 %v1170
    %1202 = vmatpush1.bf16.msra.mxu0 %v1169
    %1203 = vmatprep.subr.bf16.mxu0 %v1172
    %1204 = vmatpush1.bf16.msra.mxu0 %v1171
    %1205 = vmatprep.subr.bf16.mxu0 %v1174
    %1206 = vmatpush1.bf16.msra.mxu0 %v1173
    %1207 = vmatprep.subr.bf16.mxu0 0
    %1208 = vmatpush1.bf16.msra.mxu0 0
    %1209 = vmatprep.subr.bf16.mxu0 0
    %1210 = vmatpush1.bf16.msra.mxu0 0
    %1211 = vmatprep.subr.bf16.mxu0 0
    %1212 = vmatpush1.bf16.msra.mxu0 0
    %1213 = vmatprep.subr.bf16.mxu0 0
    %1214 = vmatpush1.bf16.msra.mxu0 0
    %1215 = vmatprep.subr.bf16.mxu0 0
    %1216 = vmatpush1.bf16.msra.mxu0 0
    %1217 = vmatprep.subr.bf16.mxu0 0
    %1218 = vmatpush1.bf16.msra.mxu0 0
    %1219 = vmatprep.subr.bf16.mxu0 0
    %1220 = vmatpush1.bf16.msra.mxu0 0
    %1221 = vmatprep.subr.bf16.mxu0 0
    %1222 = vmatpush1.bf16.msra.mxu0 0
    %1223 = vmatprep.mubr.bf16.mxu0 0
    %1224 = vmatmul.mubr.bf16.gmra.mrb[0].mxu0 %v1109
    %v1225 = vpop.f32.mrb[0].mxu0
    %v1226 = vadd.f32 %v1073, %v1225
    %v1227 = vpop.f32.mrb[0].mxu0
    %v1228 = vadd.f32 %v1075, %v1227
    %v1229 = vpop.f32.mrb[0].mxu0
    %v1230 = vpop.f32.mrb[0].mxu0
    %1231 = vdwg.mxu0
    %v1232 = vld [vmem:[#allocation8] sm:$0x1]
    %v1233 = vpack.c.bf16 %v1228, %v1228
    %vm1234 = vcmask 64512
    %v1236 = vsel %vm1234, %v992, 0
    %vm1238 = vcmask 1043456
    %v1240 = vsel %vm1238, %v1233, 0
    %1242 = vmatprep.subr.bf16.mxu0 0
    %1243 = vmatpush1.bf16.msra.mxu0 %v1240
    %1244 = vmatprep.subr.bf16.mxu0 0
    %1245 = vmatpush1.bf16.msra.mxu0 0
    %1246 = vmatprep.subr.bf16.mxu0 0
    %1247 = vmatpush1.bf16.msra.mxu0 0
    %1248 = vmatprep.subr.bf16.mxu0 0
    %1249 = vmatpush1.bf16.msra.mxu0 0
    %1250 = vmatprep.subr.bf16.mxu0 0
    %1251 = vmatpush1.bf16.msra.mxu0 0
    %1252 = vmatprep.subr.bf16.mxu0 0
    %1253 = vmatpush1.bf16.msra.mxu0 0
    %1254 = vmatprep.subr.bf16.mxu0 0
    %1255 = vmatpush1.bf16.msra.mxu0 0
    %1256 = vmatprep.subr.bf16.mxu0 0
    %1257 = vmatpush1.bf16.msra.mxu0 0
    %1258 = vmatprep.subr.bf16.mxu0 0
    %1259 = vmatpush1.bf16.msra.mxu0 0
    %1260 = vmatprep.subr.bf16.mxu0 0
    %1261 = vmatpush1.bf16.msra.mxu0 0
    %1262 = vmatprep.subr.bf16.mxu0 0
    %1263 = vmatpush1.bf16.msra.mxu0 0
    %1264 = vmatprep.subr.bf16.mxu0 0
    %1265 = vmatpush1.bf16.msra.mxu0 0
    %1266 = vmatprep.subr.bf16.mxu0 0
    %1267 = vmatpush1.bf16.msra.mxu0 0
    %1268 = vmatprep.subr.bf16.mxu0 0
    %1269 = vmatpush1.bf16.msra.mxu0 0
    %1270 = vmatprep.subr.bf16.mxu0 0
    %1271 = vmatpush1.bf16.msra.mxu0 0
    %1272 = vmatprep.subr.bf16.mxu0 0
    %1273 = vmatpush1.bf16.msra.mxu0 0
    %1274 = vmatprep.mubr.bf16.mxu0 0
    %1275 = vmatmul.mubr.bf16.gmra.mrb[0].mxu0 %v1236
    %v1276 = vpop.f32.mrb[0].mxu0
    %v1277 = vadd.f32 0.0, %v1276
    %v1278 = vpop.f32.mrb[0].mxu0
    %v1279 = vpop.f32.mrb[0].mxu0
    %v1280 = vpop.f32.mrb[0].mxu0
    %1281 = vdwg.mxu0
    %v1282 = vadd.f32 %v1226, %v1277
    %v1284 = vlaneseq
    %v1285 = vshrl.u32 %v1284, 7
    %v1286 = vsub.s32 0, %v1285
    %v1287 = vrot.slane %v1232, %v1286
    %v1289 = vadd.f32 %v1282, %v1287
    %v1290 = vmax.f32 %v1289, 0.0
    %v1291 = vpack.c.bf16 %v1290, %v1290
    %v1292 = vld [vmem:[#allocation7] sm:$0xff]
    %v1293 = vld [vmem:[#allocation7 + $0x8] sm:$0xff]
    %v1294 = vld [vmem:[#allocation7 + $0x10] sm:$0xff]
    %v1295 = vld [vmem:[#allocation7 + $0x18] sm:$0xff]
    %v1296 = vld [vmem:[#allocation7 + $0x20] sm:$0xff]
    %v1297 = vld [vmem:[#allocation7 + $0x28] sm:$0xff]
    %v1298 = vld [vmem:[#allocation7 + $0x30] sm:$0xff]
    %v1299 = vld [vmem:[#allocation7 + $0x38] sm:$0xff]
    %v1300 = vld [vmem:[#allocation7 + $0x40] sm:$0xff]
    %v1301 = vld [vmem:[#allocation7 + $0x48] sm:$0xff]
    %v1302 = vld [vmem:[#allocation7 + $0x50] sm:$0xff]
    %v1303 = vld [vmem:[#allocation7 + $0x58] sm:$0xff]
    %v1304 = vld [vmem:[#allocation7 + $0x60] sm:$0xff]
    %v1305 = vld [vmem:[#allocation7 + $0x68] sm:$0xff]
    %v1306 = vld [vmem:[#allocation7 + $0x70] sm:$0xff]
    %v1307 = vld [vmem:[#allocation7 + $0x78] sm:$0xff]
    %v1324 = vunpack.c.l.b16 %v1292
    %v1325 = vunpack.c.h.b16 %v1292
    %v1326 = vunpack.c.l.b16 %v1293
    %v1327 = vunpack.c.h.b16 %v1293
    %v1328 = vunpack.c.l.b16 %v1294
    %v1329 = vunpack.c.h.b16 %v1294
    %v1330 = vunpack.c.l.b16 %v1295
    %v1331 = vunpack.c.h.b16 %v1295
    %v1332 = vunpack.c.l.b16 %v1296
    %v1333 = vunpack.c.h.b16 %v1296
    %v1334 = vunpack.c.l.b16 %v1297
    %v1335 = vunpack.c.h.b16 %v1297
    %v1336 = vunpack.c.l.b16 %v1298
    %v1337 = vunpack.c.h.b16 %v1298
    %v1338 = vunpack.c.l.b16 %v1299
    %v1339 = vunpack.c.h.b16 %v1299
    %v1340 = vunpack.c.l.b16 %v1300
    %v1341 = vunpack.c.h.b16 %v1300
    %v1342 = vunpack.c.l.b16 %v1301
    %v1343 = vunpack.c.h.b16 %v1301
    %v1344 = vunpack.c.l.b16 %v1302
    %v1345 = vunpack.c.h.b16 %v1302
    %v1346 = vunpack.c.l.b16 %v1303
    %v1347 = vunpack.c.h.b16 %v1303
    %v1348 = vunpack.c.l.b16 %v1304
    %v1349 = vunpack.c.h.b16 %v1304
    %v1350 = vunpack.c.l.b16 %v1305
    %v1351 = vunpack.c.h.b16 %v1305
    %v1352 = vunpack.c.l.b16 %v1306
    %v1353 = vunpack.c.h.b16 %v1306
    %v1354 = vunpack.c.l.b16 %v1307
    %v1355 = vunpack.c.h.b16 %v1307
    %v1356 = vpack.c.b16 %v1326, %v1324
    %v1357 = vpack.c.b16 %v1327, %v1325
    %v1358 = vpack.c.b16 %v1330, %v1328
    %v1359 = vpack.c.b16 %v1331, %v1329
    %v1360 = vpack.c.b16 %v1334, %v1332
    %v1361 = vpack.c.b16 %v1335, %v1333
    %v1362 = vpack.c.b16 %v1338, %v1336
    %v1363 = vpack.c.b16 %v1339, %v1337
    %v1364 = vpack.c.b16 %v1342, %v1340
    %v1365 = vpack.c.b16 %v1343, %v1341
    %v1366 = vpack.c.b16 %v1346, %v1344
    %v1367 = vpack.c.b16 %v1347, %v1345
    %v1368 = vpack.c.b16 %v1350, %v1348
    %v1369 = vpack.c.b16 %v1351, %v1349
    %v1370 = vpack.c.b16 %v1354, %v1352
    %v1371 = vpack.c.b16 %v1355, %v1353
    %1388 = vmatprep.subr.bf16.mxu0 %v1357
    %1389 = vmatpush1.bf16.msra.mxu0 %v1356
    %1390 = vmatprep.subr.bf16.mxu0 %v1359
    %1391 = vmatpush1.bf16.msra.mxu0 %v1358
    %1392 = vmatprep.subr.bf16.mxu0 %v1361
    %1393 = vmatpush1.bf16.msra.mxu0 %v1360
    %1394 = vmatprep.subr.bf16.mxu0 %v1363
    %1395 = vmatpush1.bf16.msra.mxu0 %v1362
    %1396 = vmatprep.subr.bf16.mxu0 %v1365
    %1397 = vmatpush1.bf16.msra.mxu0 %v1364
    %1398 = vmatprep.subr.bf16.mxu0 %v1367
    %1399 = vmatpush1.bf16.msra.mxu0 %v1366
    %1400 = vmatprep.subr.bf16.mxu0 %v1369
    %1401 = vmatpush1.bf16.msra.mxu0 %v1368
    %1402 = vmatprep.subr.bf16.mxu0 %v1371
    %1403 = vmatpush1.bf16.msra.mxu0 %v1370
    %1404 = vmatprep.subr.bf16.mxu0 0
    %1405 = vmatpush1.bf16.msra.mxu0 0
    %1406 = vmatprep.subr.bf16.mxu0 0
    %1407 = vmatpush1.bf16.msra.mxu0 0
    %1408 = vmatprep.subr.bf16.mxu0 0
    %1409 = vmatpush1.bf16.msra.mxu0 0
    %1410 = vmatprep.subr.bf16.mxu0 0
    %1411 = vmatpush1.bf16.msra.mxu0 0
    %1412 = vmatprep.subr.bf16.mxu0 0
    %1413 = vmatpush1.bf16.msra.mxu0 0
    %1414 = vmatprep.subr.bf16.mxu0 0
    %1415 = vmatpush1.bf16.msra.mxu0 0
    %1416 = vmatprep.subr.bf16.mxu0 0
    %1417 = vmatpush1.bf16.msra.mxu0 0
    %1418 = vmatprep.subr.bf16.mxu0 0
    %1419 = vmatpush1.bf16.msra.mxu0 0
    %1420 = vmatprep.mubr.bf16.mxu0 0
    %1421 = vmatmul.mubr.bf16.gmra.mrb[0].mxu0 %v1291
    %v1422 = vpop.f32.mrb[0].mxu0
    %v1423 = vadd.f32 0.0, %v1422
    %v1424 = vpop.f32.mrb[0].mxu0
    %v1425 = vadd.f32 0.0, %v1424
    %v1426 = vpop.f32.mrb[0].mxu0
    %v1427 = vpop.f32.mrb[0].mxu0
    %1428 = vdwg.mxu0
    %s1429 = scalar_lea.vmem [#allocation8], 1
    %v1430 = vld [vmem:[%s1429] sm:$0x1]
    %v1431 = vpack.c.bf16 %v1425, %v1425
    %v1433 = vsel %vm1238, %v1431, 0
    %1435 = vmatprep.subr.bf16.mxu0 0
    %1436 = vmatpush1.bf16.msra.mxu0 %v1433
    %1437 = vmatprep.subr.bf16.mxu0 0
    %1438 = vmatpush1.bf16.msra.mxu0 0
    %1439 = vmatprep.subr.bf16.mxu0 0
    %1440 = vmatpush1.bf16.msra.mxu0 0
    %1441 = vmatprep.subr.bf16.mxu0 0
    %1442 = vmatpush1.bf16.msra.mxu0 0
    %1443 = vmatprep.subr.bf16.mxu0 0
    %1444 = vmatpush1.bf16.msra.mxu0 0
    %1445 = vmatprep.subr.bf16.mxu0 0
    %1446 = vmatpush1.bf16.msra.mxu0 0
    %1447 = vmatprep.subr.bf16.mxu0 0
    %1448 = vmatpush1.bf16.msra.mxu0 0
    %1449 = vmatprep.subr.bf16.mxu0 0
    %1450 = vmatpush1.bf16.msra.mxu0 0
    %1451 = vmatprep.subr.bf16.mxu0 0
    %1452 = vmatpush1.bf16.msra.mxu0 0
    %1453 = vmatprep.subr.bf16.mxu0 0
    %1454 = vmatpush1.bf16.msra.mxu0 0
    %1455 = vmatprep.subr.bf16.mxu0 0
    %1456 = vmatpush1.bf16.msra.mxu0 0
    %1457 = vmatprep.subr.bf16.mxu0 0
    %1458 = vmatpush1.bf16.msra.mxu0 0
    %1459 = vmatprep.subr.bf16.mxu0 0
    %1460 = vmatpush1.bf16.msra.mxu0 0
    %1461 = vmatprep.subr.bf16.mxu0 0
    %1462 = vmatpush1.bf16.msra.mxu0 0
    %1463 = vmatprep.subr.bf16.mxu0 0
    %1464 = vmatpush1.bf16.msra.mxu0 0
    %1465 = vmatprep.subr.bf16.mxu0 0
    %1466 = vmatpush1.bf16.msra.mxu0 0
    %1467 = vmatprep.mubr.bf16.mxu0 0
    %1468 = vmatmul.mubr.bf16.gmra.mrb[0].mxu0 %v1236
    %v1469 = vpop.f32.mrb[0].mxu0
    %v1470 = vadd.f32 0.0, %v1469
    %v1471 = vpop.f32.mrb[0].mxu0
    %v1472 = vpop.f32.mrb[0].mxu0
    %v1473 = vpop.f32.mrb[0].mxu0
    %1474 = vdwg.mxu0
    %v1475 = vadd.f32 %v1423, %v1470
    %v1477 = vlaneseq
    %v1478 = vshrl.u32 %v1477, 7
    %v1479 = vsub.s32 0, %v1478
    %v1480 = vrot.slane %v1430, %v1479
    %v1482 = vadd.f32 %v1475, %v1480
    %v1483 = vmax.f32 %v1482, 0.0
    %v1485 = vcombine.high %v1483, %v1483
    %v1487 = vsel %vm1238, %v1483, -inf
    %v1488 = vrot.slane %v1487, 4
    %v1489 = vmax.f32 %v1487, %v1488
    %v1490 = vrot.slane %v1489, 2
    %v1491 = vmax.f32 %v1489, %v1490
    %v1492 = vrot.slane %v1491, 1
    %v1493 = vmax.f32 %v1491, %v1492
    %v1494 = vsel %vm1238, %v1485, -inf
    %v1495 = vrot.slane %v1494, 4
    %v1496 = vmax.f32 %v1494, %v1495
    %v1497 = vrot.slane %v1496, 2
    %v1498 = vmax.f32 %v1496, %v1497
    %v1499 = vrot.slane %v1498, 1
    %v1500 = vmax.f32 %v1498, %v1499
    %v1501 = vpack.c.bf16 %v1493, %v1493
    %v1502 = vpack.c.bf16 %v1500, %v1500
    %v1503 = vld [vmem:[#allocation10] sm:$0xf]
    %v1504 = vld [vmem:[#allocation10 + $0x4] sm:$0xf]
    %v1505 = vld [vmem:[#allocation10 + $0x8] sm:$0xf]
    %v1506 = vld [vmem:[#allocation10 + $0xc] sm:$0xf]
    %v1507 = vld [vmem:[#allocation10 + $0x10] sm:$0xf]
    %v1508 = vld [vmem:[#allocation10 + $0x14] sm:$0xf]
    %v1509 = vld [vmem:[#allocation10 + $0x18] sm:$0xf]
    %v1510 = vld [vmem:[#allocation10 + $0x1c] sm:$0xf]
    %v1511 = vld [vmem:[#allocation10 + $0x20] sm:$0xf]
    %v1512 = vld [vmem:[#allocation10 + $0x24] sm:$0xf]
    %v1513 = vld [vmem:[#allocation10 + $0x28] sm:$0xf]
    %v1514 = vld [vmem:[#allocation10 + $0x2c] sm:$0xf]
    %v1515 = vld [vmem:[#allocation10 + $0x30] sm:$0xf]
    %v1516 = vld [vmem:[#allocation10 + $0x34] sm:$0xf]
    %v1517 = vld [vmem:[#allocation10 + $0x38] sm:$0xf]
    %v1518 = vld [vmem:[#allocation10 + $0x3c] sm:$0xf]
    %v1519 = vld [vmem:[#allocation11] sm:$0x1]
    %v1521 = vlaneseq
    %v1522 = vshrl.u32 %v1521, 7
    %v1523 = vsub.s32 0, %v1522
    %v1524 = vrot.slane %v1519, %v1523
    %v1528 = vunpack.c.l.b16 %v1501
    %v1529 = vunpack.c.l.b16 %v1502
    %v1530 = vsel %vm1095, %v1529, %v1528
    %v1531 = vpack.c.b16 %v1530, %v1530
    %v1549 = vunpack.c.l.b16 %v1503
    %v1550 = vunpack.c.l.b16 %v1504
    %v1551 = vunpack.c.l.b16 %v1505
    %v1552 = vunpack.c.l.b16 %v1506
    %v1553 = vunpack.c.l.b16 %v1507
    %v1554 = vunpack.c.l.b16 %v1508
    %v1555 = vunpack.c.l.b16 %v1509
    %v1556 = vunpack.c.l.b16 %v1510
    %v1557 = vunpack.c.l.b16 %v1511
    %v1558 = vunpack.c.l.b16 %v1512
    %v1559 = vunpack.c.l.b16 %v1513
    %v1560 = vunpack.c.l.b16 %v1514
    %v1561 = vunpack.c.l.b16 %v1515
    %v1562 = vunpack.c.l.b16 %v1516
    %v1563 = vunpack.c.l.b16 %v1517
    %v1564 = vunpack.c.l.b16 %v1518
    %v1565 = vpack.c.b16 %v1550, %v1549
    %v1566 = vpack.c.b16 %v1552, %v1551
    %v1567 = vpack.c.b16 %v1554, %v1553
    %v1568 = vpack.c.b16 %v1556, %v1555
    %v1569 = vpack.c.b16 %v1558, %v1557
    %v1570 = vpack.c.b16 %v1560, %v1559
    %v1571 = vpack.c.b16 %v1562, %v1561
    %v1572 = vpack.c.b16 %v1564, %v1563
    %1581 = vmatprep.subr.bf16.mxu0 0
    %1582 = vmatpush1.bf16.msra.mxu0 %v1565
    %1583 = vmatprep.subr.bf16.mxu0 0
    %1584 = vmatpush1.bf16.msra.mxu0 %v1566
    %1585 = vmatprep.subr.bf16.mxu0 0
    %1586 = vmatpush1.bf16.msra.mxu0 %v1567
    %1587 = vmatprep.subr.bf16.mxu0 0
    %1588 = vmatpush1.bf16.msra.mxu0 %v1568
    %1589 = vmatprep.subr.bf16.mxu0 0
    %1590 = vmatpush1.bf16.msra.mxu0 %v1569
    %1591 = vmatprep.subr.bf16.mxu0 0
    %1592 = vmatpush1.bf16.msra.mxu0 %v1570
    %1593 = vmatprep.subr.bf16.mxu0 0
    %1594 = vmatpush1.bf16.msra.mxu0 %v1571
    %1595 = vmatprep.subr.bf16.mxu0 0
    %1596 = vmatpush1.bf16.msra.mxu0 %v1572
    %1597 = vmatprep.subr.bf16.mxu0 0
    %1598 = vmatpush1.bf16.msra.mxu0 0
    %1599 = vmatprep.subr.bf16.mxu0 0
    %1600 = vmatpush1.bf16.msra.mxu0 0
    %1601 = vmatprep.subr.bf16.mxu0 0
    %1602 = vmatpush1.bf16.msra.mxu0 0
    %1603 = vmatprep.subr.bf16.mxu0 0
    %1604 = vmatpush1.bf16.msra.mxu0 0
    %1605 = vmatprep.subr.bf16.mxu0 0
    %1606 = vmatpush1.bf16.msra.mxu0 0
    %1607 = vmatprep.subr.bf16.mxu0 0
    %1608 = vmatpush1.bf16.msra.mxu0 0
    %1609 = vmatprep.subr.bf16.mxu0 0
    %1610 = vmatpush1.bf16.msra.mxu0 0
    %1611 = vmatprep.subr.bf16.mxu0 0
    %1612 = vmatpush1.bf16.msra.mxu0 0
    %1613 = vmatprep.mubr.bf16.mxu0 0
    %1614 = vmatmul.mubr.bf16.gmra.mrb[0].mxu0 %v1531
    %v1615 = vpop.f32.mrb[0].mxu0
    %v1616 = vadd.f32 %v1524, %v1615
    %v1617 = vpop.f32.mrb[0].mxu0
    %v1618 = vpop.f32.mrb[0].mxu0
    %v1619 = vpop.f32.mrb[0].mxu0
    %1620 = vdwg.mxu0
    %v1621 = vmax.f32 %v1616, 0.0
    %v1622 = vpack.c.bf16 %v1621, %v1621
    %v1623 = vld [vmem:[#allocation13] sm:$0xf]
    %v1624 = vld [vmem:[#allocation13 + $0x4] sm:$0xf]
    %v1625 = vld [vmem:[#allocation13 + $0x8] sm:$0xf]
    %v1626 = vld [vmem:[#allocation13 + $0xc] sm:$0xf]
    %v1627 = vld [vmem:[#allocation13 + $0x10] sm:$0xf]
    %v1628 = vld [vmem:[#allocation13 + $0x14] sm:$0xf]
    %v1629 = vld [vmem:[#allocation13 + $0x18] sm:$0xf]
    %v1630 = vld [vmem:[#allocation13 + $0x1c] sm:$0xf]
    %v1631 = vld [vmem:[#allocation13 + $0x20] sm:$0xf]
    %v1632 = vld [vmem:[#allocation13 + $0x24] sm:$0xf]
    %v1633 = vld [vmem:[#allocation13 + $0x28] sm:$0xf]
    %v1634 = vld [vmem:[#allocation13 + $0x2c] sm:$0xf]
    %v1635 = vld [vmem:[#allocation13 + $0x30] sm:$0xf]
    %v1636 = vld [vmem:[#allocation13 + $0x34] sm:$0xf]
    %v1637 = vld [vmem:[#allocation13 + $0x38] sm:$0xf]
    %v1638 = vld [vmem:[#allocation13 + $0x3c] sm:$0xf]
    %v1639 = vld [vmem:[#allocation14] sm:$0x1]
    %v1641 = vlaneseq
    %v1642 = vshrl.u32 %v1641, 7
    %v1643 = vsub.s32 0, %v1642
    %v1644 = vrot.slane %v1639, %v1643
    %v1662 = vunpack.c.l.b16 %v1623
    %v1663 = vunpack.c.l.b16 %v1624
    %v1664 = vunpack.c.l.b16 %v1625
    %v1665 = vunpack.c.l.b16 %v1626
    %v1666 = vunpack.c.l.b16 %v1627
    %v1667 = vunpack.c.l.b16 %v1628
    %v1668 = vunpack.c.l.b16 %v1629
    %v1669 = vunpack.c.l.b16 %v1630
    %v1670 = vunpack.c.l.b16 %v1631
    %v1671 = vunpack.c.l.b16 %v1632
    %v1672 = vunpack.c.l.b16 %v1633
    %v1673 = vunpack.c.l.b16 %v1634
    %v1674 = vunpack.c.l.b16 %v1635
    %v1675 = vunpack.c.l.b16 %v1636
    %v1676 = vunpack.c.l.b16 %v1637
    %v1677 = vunpack.c.l.b16 %v1638
    %v1678 = vpack.c.b16 %v1663, %v1662
    %v1679 = vpack.c.b16 %v1665, %v1664
    %v1680 = vpack.c.b16 %v1667, %v1666
    %v1681 = vpack.c.b16 %v1669, %v1668
    %v1682 = vpack.c.b16 %v1671, %v1670
    %v1683 = vpack.c.b16 %v1673, %v1672
    %v1684 = vpack.c.b16 %v1675, %v1674
    %v1685 = vpack.c.b16 %v1677, %v1676
    %1694 = vmatprep.subr.bf16.mxu0 0
    %1695 = vmatpush1.bf16.msra.mxu0 %v1678
    %1696 = vmatprep.subr.bf16.mxu0 0
    %1697 = vmatpush1.bf16.msra.mxu0 %v1679
    %1698 = vmatprep.subr.bf16.mxu0 0
    %1699 = vmatpush1.bf16.msra.mxu0 %v1680
    %1700 = vmatprep.subr.bf16.mxu0 0
    %1701 = vmatpush1.bf16.msra.mxu0 %v1681
    %1702 = vmatprep.subr.bf16.mxu0 0
    %1703 = vmatpush1.bf16.msra.mxu0 %v1682
    %1704 = vmatprep.subr.bf16.mxu0 0
    %1705 = vmatpush1.bf16.msra.mxu0 %v1683
    %1706 = vmatprep.subr.bf16.mxu0 0
    %1707 = vmatpush1.bf16.msra.mxu0 %v1684
    %1708 = vmatprep.subr.bf16.mxu0 0
    %1709 = vmatpush1.bf16.msra.mxu0 %v1685
    %1710 = vmatprep.subr.bf16.mxu0 0
    %1711 = vmatpush1.bf16.msra.mxu0 0
    %1712 = vmatprep.subr.bf16.mxu0 0
    %1713 = vmatpush1.bf16.msra.mxu0 0
    %1714 = vmatprep.subr.bf16.mxu0 0
    %1715 = vmatpush1.bf16.msra.mxu0 0
    %1716 = vmatprep.subr.bf16.mxu0 0
    %1717 = vmatpush1.bf16.msra.mxu0 0
    %1718 = vmatprep.subr.bf16.mxu0 0
    %1719 = vmatpush1.bf16.msra.mxu0 0
    %1720 = vmatprep.subr.bf16.mxu0 0
    %1721 = vmatpush1.bf16.msra.mxu0 0
    %1722 = vmatprep.subr.bf16.mxu0 0
    %1723 = vmatpush1.bf16.msra.mxu0 0
    %1724 = vmatprep.subr.bf16.mxu0 0
    %1725 = vmatpush1.bf16.msra.mxu0 0
    %1726 = vmatprep.mubr.bf16.mxu0 0
    %1727 = vmatmul.mubr.bf16.gmra.mrb[0].mxu0 %v1622
    %v1728 = vpop.f32.mrb[0].mxu0
    %v1729 = vadd.f32 %v1644, %v1728
    %v1730 = vpop.f32.mrb[0].mxu0
    %v1731 = vpop.f32.mrb[0].mxu0
    %v1732 = vpop.f32.mrb[0].mxu0
    %1733 = vdwg.mxu0
    %1734 = vst [vmem:[#allocation16] sm:$0x3] %v1729
    // Predicated region
    $region110: #{graph_of_graphs_forward.1} parent=1 // pred_check
      _
    $region111: #{graph_of_graphs_forward.1} parent=1 // pred_check_branch
      %1736 = sbr.rel (0) target = $region113
    $region112: #{graph_of_graphs_forward.1} parent=1 // pred_region
      %s1738 = ssub.s32 32, 32
      %1739 = vsyncadd [#allocation4], %s1738
      %s1741 = sshll.u32 [#allocation16], 4
      %s1742 = int_to_ptr.vmem [resolvable:$true] %s1741
      %1744 = dma.vmem_to_hbm [thread:$0]  %s1742, 32, %s19, [#allocation4]
    $region113: #{graph_of_graphs_forward.1} parent=1 // pred_fallthru
      _
    // Predicated region
    $region114: #{graph_of_graphs_forward.1} parent=1 // pred_check
      _
    $region115: #{graph_of_graphs_forward.1} parent=1 // pred_check_branch
      %1746 = sbr.rel (0) target = $region117
    $region116: #{graph_of_graphs_forward.1} parent=1 // pred_region
      %1747 = dma.done [#allocation4], 32
    $region117: #{graph_of_graphs_forward.1} parent=1 // pred_fallthru
      _
    %1748 = vsyncpa [#allocation3], 1
    %1749 = vsyncpa [#allocation6], 1
    %1750 = vsyncpa [#allocation9], 1
    %1751 = vsyncpa [#allocation12], 1
    %1752 = vsyncpa [#allocation15], 1
    %1753 = vsyncpa [#allocation4], 1

</llo_original>
